<compile_context>
chip_gen: v7x
topology: tpu7x:2x2x1
jax: 0.10.0
libtpu: 0.0.40
codegen_flags: <defaults>
</compile_context>

<pallas_src>
import jax
import jax.numpy as jnp
from jax.experimental import pallas as pl
from jax.experimental.pallas import tpu as pltpu


def _value_kernel(x_ref, scal_ref, wconv_ref, bconv_ref, pw1_ref, w1s_ref,
                  b1_ref, w2_ref, b2_ref, out_ref):
    """One grid step processes TB boards.

    x_ref     : [TB, H*W*Cin]        bf16  raw NHWC board rows (no im2col)
    scal_ref  : [TB, S]              bf16
    wconv_ref : [H*W*Cin, H*W*Cout]  bf16  3x3 conv (pad=1) folded into a
                                           fixed banded matrix
    bconv_ref : [1, H*W*Cout]        f32   conv bias tiled over pixels
    pw1_ref   : [H*W*Cout, hidden]   bf16  (mean pool ∘ dense1)/HW, board part
    w1s_ref   : [S, hidden]          bf16  dense1, scalars part
    b1_ref    : [1, hidden]          f32
    w2_ref    : [hidden, 8]          bf16  value weight replicated over 8 lanes
    b2_ref    : [1, 8]               f32
    out_ref   : [TB, 8]              f32   value replicated over 8 lanes
    """
    # 3x3 conv (pad=1) + bias + ReLU as a single MXU matmul (f32 accumulation).
    conv = jnp.dot(x_ref[...], wconv_ref[...],
                   preferred_element_type=jnp.float32)        # [TB, H*W*Cout]
    conv = jnp.maximum(conv + bconv_ref[...], 0.0)

    # Global mean pool + board half of dense(hidden), fused into one matmul.
    hb = jnp.dot(conv.astype(jnp.bfloat16), pw1_ref[...],
                 preferred_element_type=jnp.float32)          # [TB, hidden]
    hs = jnp.dot(scal_ref[...], w1s_ref[...],
                 preferred_element_type=jnp.float32)          # [TB, hidden]
    hid = jnp.maximum(hb + hs + b1_ref[...], 0.0)

    # Dense(1) + tanh, value replicated across 8 lanes.
    v = jnp.dot(hid.astype(jnp.bfloat16), w2_ref[...],
                preferred_element_type=jnp.float32) + b2_ref[...]
    out_ref[...] = jnp.tanh(v)                                # [TB, 8]


def model_wrapper_forward(board_nchw, scalars, params, *, max_tb=128):
    """board_nchw: [B, Cin, H, W], scalars: [B, S] -> (value [B, 1],)"""
    B, Cin, H, W = board_nchw.shape
    S = scalars.shape[1]
    Cout = params["wconv"].shape[-1]
    hidden = params["w1b"].shape[-1]
    HW = H * W
    K_IN = HW * Cin          # conv-matmul contraction dim
    N_CONV = HW * Cout       # conv-matmul output dim
    VAL_LANES = 8            # value replicated over 8 lanes (block == full dim)

    def rup(a, m):
        return ((a + m - 1) // m) * m

    # Adaptive batch tile: big enough to amortize the ~0.35us/step overhead at
    # serving batch sizes, >=16 so bf16 blocks fill a (16,128) sublane tile,
    # but no larger than needed for tiny batches.
    tb = max(16, min(max_tb, rup(B, 16)))
    n_steps = -(-B // tb)
    if n_steps > 1 and n_steps % 2:
        n_steps += 1         # even grid -> clean split across v7x's 2 TCs
    B_pad = n_steps * tb

    # --- Glue (pure JAX, one pass): NCHW -> NHWC -> [B_pad, H*W*Cin] bf16. ---
    x2d = jnp.transpose(board_nchw, (0, 2, 3, 1)).astype(jnp.bfloat16)
    x2d = x2d.reshape(B, K_IN)
    if B_pad != B:
        x2d = jnp.pad(x2d, ((0, B_pad - B), (0, 0)))
    scal = scalars.astype(jnp.bfloat16)
    if B_pad != B:
        scal = jnp.pad(scal, ((0, B_pad - B), (0, 0)))

    # --- Fold the 3x3 pad=1 conv into one fixed banded matrix (built once).
    # Wfull[(y_in,x_in,c),(y_out,x_out,co)] = wconv[dy*3+dx][c,co]
    #   where dy = y_in - y_out + 1, dx = x_in - x_out + 1 (zero outside band,
    #   which also encodes the zero padding at the image border).
    wconv = params["wconv"].astype(jnp.float32)                    # [9,Cin,Cout]
    wfull = jnp.zeros((K_IN, N_CONV), jnp.float32)
    for dy in range(3):
        ey = jnp.eye(H, k=1 - dy, dtype=jnp.float32)
        for dx in range(3):
            ex = jnp.eye(W, k=1 - dx, dtype=jnp.float32)
            wfull = wfull + jnp.kron(jnp.kron(ey, ex), wconv[dy * 3 + dx])
    wfull = wfull.astype(jnp.bfloat16)                             # [K_IN, N_CONV]

    bconv_full = jnp.tile(params["bconv"].astype(jnp.float32), (1, HW))  # [1,N_CONV]
    # Fused (global mean pool ∘ dense1-board-part): fixed size, linear in tb.
    pw1 = (jnp.tile(params["w1b"], (HW, 1)) / HW).astype(jnp.bfloat16)   # [N_CONV,hid]
    w1s = params["w1s"].astype(jnp.bfloat16)
    b1 = params["b1"].astype(jnp.float32)
    w2r = jnp.tile(params["w2"], (1, VAL_LANES)).astype(jnp.bfloat16)    # [hid,8]
    b2r = jnp.tile(params["b2"], (1, VAL_LANES)).astype(jnp.float32)     # [1,8]

    rep = lambda i: (0, 0)  # weights: constant block index -> resident, no re-DMA
    out = pl.pallas_call(
        _value_kernel,
        out_shape=jax.ShapeDtypeStruct((B_pad, VAL_LANES), jnp.float32),
        grid=(n_steps,),
        in_specs=[
            pl.BlockSpec((tb, K_IN), lambda i: (i, 0)),      # raw board block
            pl.BlockSpec((tb, S), lambda i: (i, 0)),         # scalars block
            pl.BlockSpec((K_IN, N_CONV), rep),               # folded conv weight
            pl.BlockSpec((1, N_CONV), rep),                  # conv bias (tiled)
            pl.BlockSpec((N_CONV, hidden), rep),             # pool ∘ dense1 (board)
            pl.BlockSpec((S, hidden), rep),                  # dense1 (scalars)
            pl.BlockSpec((1, hidden), rep),                  # b1
            pl.BlockSpec((hidden, VAL_LANES), rep),          # value weight
            pl.BlockSpec((1, VAL_LANES), rep),               # value bias
        ],
        out_specs=pl.BlockSpec((tb, VAL_LANES), lambda i: (i, 0)),
        compiler_params=pltpu.CompilerParams(
            dimension_semantics=("parallel",),
            # ~6 MiB actually used per step; 32 MiB is within the scoped
            # default on v6e and under v7x's 64 MiB/TC physical VMEM.
            vmem_limit_bytes=32 * 1024 * 1024),
    )(x2d, scal, wfull, bconv_full, pw1, w1s, b1, w2r, b2r)

    return (out[:B, :1],)


def _reference_forward(board_nchw, scalars, params):
    """Pure-JAX f32 reference (same math) for the correctness check."""
    B, Cin, H, W = board_nchw.shape
    x = jnp.transpose(board_nchw, (0, 2, 3, 1)).astype(jnp.float32)
    xp = jnp.pad(x, ((0, 0), (1, 1), (1, 1), (0, 0)))
    Cout = params["wconv"].shape[-1]
    acc = jnp.zeros((B, H, W, Cout), jnp.float32)
    for dy in range(3):
        for dx in range(3):
            acc = acc + jnp.einsum("bhwc,co->bhwo",
                                   xp[:, dy:dy + H, dx:dx + W, :],
                                   params["wconv"][dy * 3 + dx])
    acc = jnp.maximum(acc + params["bconv"][0], 0.0)
    feat = acc.reshape(B, H * W, Cout).mean(axis=1)
    h = jnp.maximum(feat @ params["w1b"] + scalars @ params["w1s"] + params["b1"], 0.0)
    return jnp.tanh(h @ params["w2"] + params["b2"])


def init_params(key, cin, cout, n_scalars, hidden):
    ks = jax.random.split(key, 7)
    scale = 0.1
    return {
        "wconv": scale * jax.random.normal(ks[0], (9, cin, cout), jnp.float32),
        "bconv": scale * jax.random.normal(ks[1], (1, cout), jnp.float32),
        "w1b":   scale * jax.random.normal(ks[2], (cout, hidden), jnp.float32),
        "w1s":   scale * jax.random.normal(ks[3], (n_scalars, hidden), jnp.float32),
        "b1":    scale * jax.random.normal(ks[4], (1, hidden), jnp.float32),
        "w2":    scale * jax.random.normal(ks[5], (hidden, 1), jnp.float32),
        "b2":    scale * jax.random.normal(ks[6], (1, 1), jnp.float32),
    }


if __name__ == "__main__":
    B, Cin, H, W = 2, 4, 8, 8
    S, Cout, hidden = 8, 32, 32

    key = jax.random.PRNGKey(0)
    k_board, k_scal, k_par = jax.random.split(key, 3)
    board = jax.random.normal(k_board, (B, Cin, H, W), jnp.float32)   # NCHW like PyTorch
    scalars = jax.random.normal(k_scal, (B, S), jnp.float32)
    params = init_params(k_par, Cin, Cout, S, hidden)

    (value,) = model_wrapper_forward(board, scalars, params)
    value = jax.block_until_ready(value)

    ref = _reference_forward(board, scalars, params)
    assert value.shape == (B, 1)
    # bf16 matmul operands (f32 accumulation) vs a pure-f32 reference -> loose tol.
    assert jnp.allclose(value, ref, atol=3e-2, rtol=3e-2)

    print("KERNEL_OK")
</pallas_src>

<mosaic_0001>
module attributes {stable_mosaic.version = 11 : i64} {
  func.func @_value_kernel(%arg0: i32, %arg1: memref<16x256xbf16, #tpu.memory_space<vmem>>, %arg2: memref<16x8xbf16, #tpu.memory_space<vmem>>, %arg3: memref<256x2048xbf16, #tpu.memory_space<vmem>>, %arg4: memref<1x2048xf32, #tpu.memory_space<vmem>>, %arg5: memref<2048x32xbf16, #tpu.memory_space<vmem>>, %arg6: memref<8x32xbf16, #tpu.memory_space<vmem>>, %arg7: memref<1x32xf32, #tpu.memory_space<vmem>>, %arg8: memref<32x8xbf16, #tpu.memory_space<vmem>>, %arg9: memref<1x8xf32, #tpu.memory_space<vmem>>, %arg10: memref<16x8xf32, #tpu.memory_space<vmem>>) attributes {dimension_semantics = [#tpu.dimension_semantics<parallel>], iteration_bounds = array<i64: 1>, scalar_prefetch = 0 : i64, scratch_operands = 0 : i64, tpu.core_type = #tpu.core_type<tc>, window_params = [{transform_indices = @transform_0, window_bounds = array<i64: 16, 256>}, {transform_indices = @transform_1, window_bounds = array<i64: 16, 8>}, {pipeline_mode = #tpu.pipeline_mode<synchronous>, transform_indices = @transform_2, window_bounds = array<i64: 256, 2048>}, {pipeline_mode = #tpu.pipeline_mode<synchronous>, transform_indices = @transform_3, window_bounds = array<i64: 1, 2048>}, {pipeline_mode = #tpu.pipeline_mode<synchronous>, transform_indices = @transform_4, window_bounds = array<i64: 2048, 32>}, {pipeline_mode = #tpu.pipeline_mode<synchronous>, transform_indices = @transform_5, window_bounds = array<i64: 8, 32>}, {pipeline_mode = #tpu.pipeline_mode<synchronous>, transform_indices = @transform_6, window_bounds = array<i64: 1, 32>}, {pipeline_mode = #tpu.pipeline_mode<synchronous>, transform_indices = @transform_7, window_bounds = array<i64: 32, 8>}, {pipeline_mode = #tpu.pipeline_mode<synchronous>, transform_indices = @transform_8, window_bounds = array<i64: 1, 8>}, {transform_indices = @transform_9, window_bounds = array<i64: 16, 8>}]} {
    %c0 = arith.constant 0 : index
    %c0_0 = arith.constant 0 : index
    %0 = vector.load %arg1[%c0, %c0_0] : memref<16x256xbf16, #tpu.memory_space<vmem>>, vector<16x256xbf16>
    %c0_1 = arith.constant 0 : index
    %c0_2 = arith.constant 0 : index
    %1 = vector.load %arg3[%c0_1, %c0_2] : memref<256x2048xbf16, #tpu.memory_space<vmem>>, vector<256x2048xbf16>
    %cst = arith.constant dense<0.000000e+00> : vector<16x2048xf32>
    %2 = tpu.matmul %0, %1, %cst {dimension_numbers = #tpu.dot_dimension_numbers<[1], [0], [0], [1], [0, 0, 1, 1], [], []>} : vector<16x256xbf16>, vector<256x2048xbf16>, vector<16x2048xf32> -> vector<16x2048xf32>
    %c0_3 = arith.constant 0 : index
    %c0_4 = arith.constant 0 : index
    %3 = vector.load %arg4[%c0_3, %c0_4] : memref<1x2048xf32, #tpu.memory_space<vmem>>, vector<1x2048xf32>
    %4 = vector.broadcast %3 : vector<1x2048xf32> to vector<16x2048xf32>
    %5 = arith.addf %2, %4 : vector<16x2048xf32>
    %cst_5 = arith.constant 0.000000e+00 : f32
    %6 = vector.broadcast %cst_5 : f32 to vector<16x2048xf32>
    %7 = arith.maximumf %5, %6 : vector<16x2048xf32>
    %8 = arith.truncf %7 : vector<16x2048xf32> to vector<16x2048xbf16>
    %c0_6 = arith.constant 0 : index
    %c0_7 = arith.constant 0 : index
    %9 = vector.load %arg5[%c0_6, %c0_7] : memref<2048x32xbf16, #tpu.memory_space<vmem>>, vector<2048x32xbf16>
    %cst_8 = arith.constant dense<0.000000e+00> : vector<16x32xf32>
    %10 = tpu.matmul %8, %9, %cst_8 {dimension_numbers = #tpu.dot_dimension_numbers<[1], [0], [0], [1], [0, 0, 1, 1], [], []>} : vector<16x2048xbf16>, vector<2048x32xbf16>, vector<16x32xf32> -> vector<16x32xf32>
    %c0_9 = arith.constant 0 : index
    %c0_10 = arith.constant 0 : index
    %11 = vector.load %arg2[%c0_9, %c0_10] : memref<16x8xbf16, #tpu.memory_space<vmem>>, vector<16x8xbf16>
    %c0_11 = arith.constant 0 : index
    %c0_12 = arith.constant 0 : index
    %12 = vector.load %arg6[%c0_11, %c0_12] : memref<8x32xbf16, #tpu.memory_space<vmem>>, vector<8x32xbf16>
    %cst_13 = arith.constant dense<0.000000e+00> : vector<16x32xf32>
    %13 = tpu.matmul %11, %12, %cst_13 {dimension_numbers = #tpu.dot_dimension_numbers<[1], [0], [0], [1], [0, 0, 1, 1], [], []>} : vector<16x8xbf16>, vector<8x32xbf16>, vector<16x32xf32> -> vector<16x32xf32>
    %14 = arith.addf %10, %13 : vector<16x32xf32>
    %c0_14 = arith.constant 0 : index
    %c0_15 = arith.constant 0 : index
    %15 = vector.load %arg7[%c0_14, %c0_15] : memref<1x32xf32, #tpu.memory_space<vmem>>, vector<1x32xf32>
    %16 = vector.broadcast %15 : vector<1x32xf32> to vector<16x32xf32>
    %17 = arith.addf %14, %16 : vector<16x32xf32>
    %cst_16 = arith.constant 0.000000e+00 : f32
    %18 = vector.broadcast %cst_16 : f32 to vector<16x32xf32>
    %19 = arith.maximumf %17, %18 : vector<16x32xf32>
    %20 = arith.truncf %19 : vector<16x32xf32> to vector<16x32xbf16>
    %c0_17 = arith.constant 0 : index
    %c0_18 = arith.constant 0 : index
    %21 = vector.load %arg8[%c0_17, %c0_18] : memref<32x8xbf16, #tpu.memory_space<vmem>>, vector<32x8xbf16>
    %cst_19 = arith.constant dense<0.000000e+00> : vector<16x8xf32>
    %22 = tpu.matmul %20, %21, %cst_19 {dimension_numbers = #tpu.dot_dimension_numbers<[1], [0], [0], [1], [0, 0, 1, 1], [], []>} : vector<16x32xbf16>, vector<32x8xbf16>, vector<16x8xf32> -> vector<16x8xf32>
    %c0_20 = arith.constant 0 : index
    %c0_21 = arith.constant 0 : index
    %23 = vector.load %arg9[%c0_20, %c0_21] : memref<1x8xf32, #tpu.memory_space<vmem>>, vector<1x8xf32>
    %24 = vector.broadcast %23 : vector<1x8xf32> to vector<16x8xf32>
    %25 = arith.addf %22, %24 : vector<16x8xf32>
    %26 = math.tanh %25 : vector<16x8xf32>
    %c0_22 = arith.constant 0 : index
    %c0_23 = arith.constant 0 : index
    %27 = vector.load %arg10[%c0_22, %c0_23] : memref<16x8xf32, #tpu.memory_space<vmem>>, vector<16x8xf32>
    tpu.vector_store %arg10[%c0_22, %c0_23], %26 {strides = array<i32>} : memref<16x8xf32, #tpu.memory_space<vmem>>, vector<16x8xf32>,
    return
  }
  func.func @transform_0(%arg0: i32) -> (i32, i32) {
    %c0_i32 = arith.constant 0 : i32
    %c0_i32_0 = arith.constant 0 : i32
    return %arg0, %c0_i32 : i32, i32
  }
  func.func @transform_1(%arg0: i32) -> (i32, i32) {
    %c0_i32 = arith.constant 0 : i32
    %c0_i32_0 = arith.constant 0 : i32
    return %arg0, %c0_i32 : i32, i32
  }
  func.func @transform_2(%arg0: i32) -> (i32, i32) {
    %c0_i32 = arith.constant 0 : i32
    %c0_i32_0 = arith.constant 0 : i32
    %c0_i32_1 = arith.constant 0 : i32
    return %c0_i32, %c0_i32_0 : i32, i32
  }
  func.func @transform_3(%arg0: i32) -> (i32, i32) {
    %c0_i32 = arith.constant 0 : i32
    %c0_i32_0 = arith.constant 0 : i32
    %c0_i32_1 = arith.constant 0 : i32
    return %c0_i32, %c0_i32_0 : i32, i32
  }
  func.func @transform_4(%arg0: i32) -> (i32, i32) {
    %c0_i32 = arith.constant 0 : i32
    %c0_i32_0 = arith.constant 0 : i32
    %c0_i32_1 = arith.constant 0 : i32
    return %c0_i32, %c0_i32_0 : i32, i32
  }
  func.func @transform_5(%arg0: i32) -> (i32, i32) {
    %c0_i32 = arith.constant 0 : i32
    %c0_i32_0 = arith.constant 0 : i32
    %c0_i32_1 = arith.constant 0 : i32
    return %c0_i32, %c0_i32_0 : i32, i32
  }
  func.func @transform_6(%arg0: i32) -> (i32, i32) {
    %c0_i32 = arith.constant 0 : i32
    %c0_i32_0 = arith.constant 0 : i32
    %c0_i32_1 = arith.constant 0 : i32
    return %c0_i32, %c0_i32_0 : i32, i32
  }
  func.func @transform_7(%arg0: i32) -> (i32, i32) {
    %c0_i32 = arith.constant 0 : i32
    %c0_i32_0 = arith.constant 0 : i32
    %c0_i32_1 = arith.constant 0 : i32
    return %c0_i32, %c0_i32_0 : i32, i32
  }
  func.func @transform_8(%arg0: i32) -> (i32, i32) {
    %c0_i32 = arith.constant 0 : i32
    %c0_i32_0 = arith.constant 0 : i32
    %c0_i32_1 = arith.constant 0 : i32
    return %c0_i32, %c0_i32_0 : i32, i32
  }
  func.func @transform_9(%arg0: i32) -> (i32, i32) {
    %c0_i32 = arith.constant 0 : i32
    %c0_i32_0 = arith.constant 0 : i32
    return %arg0, %c0_i32 : i32, i32
  }
}

</mosaic_0001>

<llo_original>
// kernel: tpu_custom_call.1
$region0: #{tpu_custom_call.1}
  #allocation0 [shape = 'u32[]', space=smem, size = 0x4, offset = 0x4, fixed_abs, tag = 'smem constant byte address 0x4 - core index']
  #allocation1 [shape = 'u32[144,128]{1,0:T(1,128)}', space=vmem, size = 0x12000, scoped, tag = 'internal scratch']
  %s0 = inlined_call_operand.vmem [shape: bf16[16,256], index: 0, kind: input, shape index: {}]
  %s1 = inlined_call_operand.vmem [shape: bf16[16,8], index: 1, kind: input, shape index: {}]
  %s2 = inlined_call_operand.hbm [shape: bf16[256,2048], index: 2, kind: input, shape index: {}]
  %s3 = inlined_call_operand.vmem [shape: f32[1,2048], index: 3, kind: input, shape index: {}]
  %s4 = inlined_call_operand.vmem [shape: bf16[2048,32], index: 4, kind: input, shape index: {}]
  %s5 = inlined_call_operand.vmem [shape: bf16[8,32], index: 5, kind: input, shape index: {}]
  %s6 = inlined_call_operand.vmem [shape: f32[1,32], index: 6, kind: input, shape index: {}]
  %s7 = inlined_call_operand.vmem [shape: bf16[32,8], index: 7, kind: input, shape index: {}]
  %s8 = inlined_call_operand.vmem [shape: f32[1,8], index: 8, kind: input, shape index: {}]
  %s9 = inlined_call_operand.vmem [shape: f32[16,8], index: 9, kind: output, shape index: {}]
  %s10 = sld [smem:[#allocation0]]
  $region50: #{tpu_custom_call.1} parent=0
    _
  %s12 = ssub.s32 1, %s10
  %s13 = scalar_select 0, %s12, %s10
  $region1: #{tpu_custom_call.1} parent=0
    #allocation2 [shape = 'u8[1048576]{0}', space=vmem, size = 0x100000, scoped, tag = 'input window, operand 2, single buffered']
    #allocation3 [shape = 's32[1]{0}', space=sflag, size = 0x4, scoped, tag = 'scoped memory for tpu_custom_call.1']
    %14 = vsyncpa [#allocation3], 0
    // Predicated region
    $region2: #{tpu_custom_call.1} parent=1 // pred_check
      _
    $region3: #{tpu_custom_call.1} parent=1 // pred_check_branch
      %16 = sbr.rel (0) target = $region5
    $region4: #{tpu_custom_call.1} parent=1 // pred_region
      _
    $region5: #{tpu_custom_call.1} parent=1 // pred_fallthru
      _
    // Predicated region
    $region6: #{tpu_custom_call.1} parent=1 // pred_check
      _
    $region7: #{tpu_custom_call.1} parent=1 // pred_check_branch
      %18 = sbr.rel (0) target = $region9
    $region8: #{tpu_custom_call.1} parent=1 // pred_region
      _
    $region9: #{tpu_custom_call.1} parent=1 // pred_fallthru
      _
    // Predicated region
    $region10: #{tpu_custom_call.1} parent=1 // pred_check
      _
    $region11: #{tpu_custom_call.1} parent=1 // pred_check_branch
      %20 = sbr.rel (0) target = $region13
    $region12: #{tpu_custom_call.1} parent=1 // pred_region
      %s22 = ssub.s32 32768, 32768
      %23 = vsyncadd [#allocation3], %s22
      %s24 = sshll.u32 [#allocation2], 4
      %s25 = int_to_ptr.vmem [resolvable:$true] %s24
      %30 = dma.hbm_to_vmem [thread:$0]  %s2, 32768, %s25, [#allocation3], 1024, 1024, 64
    $region13: #{tpu_custom_call.1} parent=1 // pred_fallthru
      _
    // Predicated region
    $region14: #{tpu_custom_call.1} parent=1 // pred_check
      _
    $region15: #{tpu_custom_call.1} parent=1 // pred_check_branch
      %32 = sbr.rel (0) target = $region17
    $region16: #{tpu_custom_call.1} parent=1 // pred_region
      _
    $region17: #{tpu_custom_call.1} parent=1 // pred_fallthru
      _
    // Predicated region
    $region18: #{tpu_custom_call.1} parent=1 // pred_check
      _
    $region19: #{tpu_custom_call.1} parent=1 // pred_check_branch
      %34 = sbr.rel (0) target = $region21
    $region20: #{tpu_custom_call.1} parent=1 // pred_region
      _
    $region21: #{tpu_custom_call.1} parent=1 // pred_fallthru
      _
    // Predicated region
    $region22: #{tpu_custom_call.1} parent=1 // pred_check
      _
    $region23: #{tpu_custom_call.1} parent=1 // pred_check_branch
      %36 = sbr.rel (0) target = $region25
    $region24: #{tpu_custom_call.1} parent=1 // pred_region
      _
    $region25: #{tpu_custom_call.1} parent=1 // pred_fallthru
      _
    // Predicated region
    $region26: #{tpu_custom_call.1} parent=1 // pred_check
      _
    $region27: #{tpu_custom_call.1} parent=1 // pred_check_branch
      %38 = sbr.rel (0) target = $region29
    $region28: #{tpu_custom_call.1} parent=1 // pred_region
      _
    $region29: #{tpu_custom_call.1} parent=1 // pred_fallthru
      _
    // Predicated region
    $region30: #{tpu_custom_call.1} parent=1 // pred_check
      _
    $region31: #{tpu_custom_call.1} parent=1 // pred_check_branch
      %40 = sbr.rel (0) target = $region33
    $region32: #{tpu_custom_call.1} parent=1 // pred_region
      _
    $region33: #{tpu_custom_call.1} parent=1 // pred_fallthru
      _
    // Predicated region
    $region34: #{tpu_custom_call.1} parent=1 // pred_check
      _
    $region35: #{tpu_custom_call.1} parent=1 // pred_check_branch
      %42 = sbr.rel (0) target = $region37
    $region36: #{tpu_custom_call.1} parent=1 // pred_region
      _
    $region37: #{tpu_custom_call.1} parent=1 // pred_fallthru
      _
    // Predicated region
    $region38: #{tpu_custom_call.1} parent=1 // pred_check
      _
    $region39: #{tpu_custom_call.1} parent=1 // pred_check_branch
      %44 = sbr.rel (0) target = $region41
    $region40: #{tpu_custom_call.1} parent=1 // pred_region
      %45 = dma.done [#allocation3], 32768
    $region41: #{tpu_custom_call.1} parent=1 // pred_fallthru
      _
    %v47 = vld [vmem:[%s0] sm:$0xff]
    %v48 = vld [vmem:[%s0 + $0x8] sm:$0xff]
    %v49 = vld [vmem:[#allocation2] sm:$0xff]
    %v50 = vld [vmem:[#allocation2 + $0x8] sm:$0xff]
    %v51 = vld [vmem:[#allocation2 + $0x10] sm:$0xff]
    %v52 = vld [vmem:[#allocation2 + $0x18] sm:$0xff]
    %v53 = vld [vmem:[#allocation2 + $0x20] sm:$0xff]
    %v54 = vld [vmem:[#allocation2 + $0x28] sm:$0xff]
    %v55 = vld [vmem:[#allocation2 + $0x30] sm:$0xff]
    %v56 = vld [vmem:[#allocation2 + $0x38] sm:$0xff]
    %v57 = vld [vmem:[#allocation2 + $0x40] sm:$0xff]
    %v58 = vld [vmem:[#allocation2 + $0x48] sm:$0xff]
    %v59 = vld [vmem:[#allocation2 + $0x50] sm:$0xff]
    %v60 = vld [vmem:[#allocation2 + $0x58] sm:$0xff]
    %v61 = vld [vmem:[#allocation2 + $0x60] sm:$0xff]
    %v62 = vld [vmem:[#allocation2 + $0x68] sm:$0xff]
    %v63 = vld [vmem:[#allocation2 + $0x70] sm:$0xff]
    %v64 = vld [vmem:[#allocation2 + $0x78] sm:$0xff]
    %v65 = vld [vmem:[#allocation2 + $0x80] sm:$0xff]
    %v66 = vld [vmem:[#allocation2 + $0x88] sm:$0xff]
    %v67 = vld [vmem:[#allocation2 + $0x90] sm:$0xff]
    %v68 = vld [vmem:[#allocation2 + $0x98] sm:$0xff]
    %v69 = vld [vmem:[#allocation2 + $0xa0] sm:$0xff]
    %v70 = vld [vmem:[#allocation2 + $0xa8] sm:$0xff]
    %v71 = vld [vmem:[#allocation2 + $0xb0] sm:$0xff]
    %v72 = vld [vmem:[#allocation2 + $0xb8] sm:$0xff]
    %v73 = vld [vmem:[#allocation2 + $0xc0] sm:$0xff]
    %v74 = vld [vmem:[#allocation2 + $0xc8] sm:$0xff]
    %v75 = vld [vmem:[#allocation2 + $0xd0] sm:$0xff]
    %v76 = vld [vmem:[#allocation2 + $0xd8] sm:$0xff]
    %v77 = vld [vmem:[#allocation2 + $0xe0] sm:$0xff]
    %v78 = vld [vmem:[#allocation2 + $0xe8] sm:$0xff]
    %v79 = vld [vmem:[#allocation2 + $0xf0] sm:$0xff]
    %v80 = vld [vmem:[#allocation2 + $0xf8] sm:$0xff]
    %v81 = vld [vmem:[#allocation2 + $0x100] sm:$0xff]
    %v82 = vld [vmem:[#allocation2 + $0x108] sm:$0xff]
    %v83 = vld [vmem:[#allocation2 + $0x110] sm:$0xff]
    %v84 = vld [vmem:[#allocation2 + $0x118] sm:$0xff]
    %v85 = vld [vmem:[#allocation2 + $0x120] sm:$0xff]
    %v86 = vld [vmem:[#allocation2 + $0x128] sm:$0xff]
    %v87 = vld [vmem:[#allocation2 + $0x130] sm:$0xff]
    %v88 = vld [vmem:[#allocation2 + $0x138] sm:$0xff]
    %v89 = vld [vmem:[#allocation2 + $0x140] sm:$0xff]
    %v90 = vld [vmem:[#allocation2 + $0x148] sm:$0xff]
    %v91 = vld [vmem:[#allocation2 + $0x150] sm:$0xff]
    %v92 = vld [vmem:[#allocation2 + $0x158] sm:$0xff]
    %v93 = vld [vmem:[#allocation2 + $0x160] sm:$0xff]
    %v94 = vld [vmem:[#allocation2 + $0x168] sm:$0xff]
    %v95 = vld [vmem:[#allocation2 + $0x170] sm:$0xff]
    %v96 = vld [vmem:[#allocation2 + $0x178] sm:$0xff]
    %v97 = vld [vmem:[#allocation2 + $0x180] sm:$0xff]
    %v98 = vld [vmem:[#allocation2 + $0x188] sm:$0xff]
    %v99 = vld [vmem:[#allocation2 + $0x190] sm:$0xff]
    %v100 = vld [vmem:[#allocation2 + $0x198] sm:$0xff]
    %v101 = vld [vmem:[#allocation2 + $0x1a0] sm:$0xff]
    %v102 = vld [vmem:[#allocation2 + $0x1a8] sm:$0xff]
    %v103 = vld [vmem:[#allocation2 + $0x1b0] sm:$0xff]
    %v104 = vld [vmem:[#allocation2 + $0x1b8] sm:$0xff]
    %v105 = vld [vmem:[#allocation2 + $0x1c0] sm:$0xff]
    %v106 = vld [vmem:[#allocation2 + $0x1c8] sm:$0xff]
    %v107 = vld [vmem:[#allocation2 + $0x1d0] sm:$0xff]
    %v108 = vld [vmem:[#allocation2 + $0x1d8] sm:$0xff]
    %v109 = vld [vmem:[#allocation2 + $0x1e0] sm:$0xff]
    %v110 = vld [vmem:[#allocation2 + $0x1e8] sm:$0xff]
    %v111 = vld [vmem:[#allocation2 + $0x1f0] sm:$0xff]
    %v112 = vld [vmem:[#allocation2 + $0x1f8] sm:$0xff]
    %v113 = vld [vmem:[#allocation2 + $0x200] sm:$0xff]
    %v114 = vld [vmem:[#allocation2 + $0x208] sm:$0xff]
    %v115 = vld [vmem:[#allocation2 + $0x210] sm:$0xff]
    %v116 = vld [vmem:[#allocation2 + $0x218] sm:$0xff]
    %v117 = vld [vmem:[#allocation2 + $0x220] sm:$0xff]
    %v118 = vld [vmem:[#allocation2 + $0x228] sm:$0xff]
    %v119 = vld [vmem:[#allocation2 + $0x230] sm:$0xff]
    %v120 = vld [vmem:[#allocation2 + $0x238] sm:$0xff]
    %v121 = vld [vmem:[#allocation2 + $0x240] sm:$0xff]
    %v122 = vld [vmem:[#allocation2 + $0x248] sm:$0xff]
    %v123 = vld [vmem:[#allocation2 + $0x250] sm:$0xff]
    %v124 = vld [vmem:[#allocation2 + $0x258] sm:$0xff]
    %v125 = vld [vmem:[#allocation2 + $0x260] sm:$0xff]
    %v126 = vld [vmem:[#allocation2 + $0x268] sm:$0xff]
    %v127 = vld [vmem:[#allocation2 + $0x270] sm:$0xff]
    %v128 = vld [vmem:[#allocation2 + $0x278] sm:$0xff]
    %v129 = vld [vmem:[#allocation2 + $0x280] sm:$0xff]
    %v130 = vld [vmem:[#allocation2 + $0x288] sm:$0xff]
    %v131 = vld [vmem:[#allocation2 + $0x290] sm:$0xff]
    %v132 = vld [vmem:[#allocation2 + $0x298] sm:$0xff]
    %v133 = vld [vmem:[#allocation2 + $0x2a0] sm:$0xff]
    %v134 = vld [vmem:[#allocation2 + $0x2a8] sm:$0xff]
    %v135 = vld [vmem:[#allocation2 + $0x2b0] sm:$0xff]
    %v136 = vld [vmem:[#allocation2 + $0x2b8] sm:$0xff]
    %v137 = vld [vmem:[#allocation2 + $0x2c0] sm:$0xff]
    %v138 = vld [vmem:[#allocation2 + $0x2c8] sm:$0xff]
    %v139 = vld [vmem:[#allocation2 + $0x2d0] sm:$0xff]
    %v140 = vld [vmem:[#allocation2 + $0x2d8] sm:$0xff]
    %v141 = vld [vmem:[#allocation2 + $0x2e0] sm:$0xff]
    %v142 = vld [vmem:[#allocation2 + $0x2e8] sm:$0xff]
    %v143 = vld [vmem:[#allocation2 + $0x2f0] sm:$0xff]
    %v144 = vld [vmem:[#allocation2 + $0x2f8] sm:$0xff]
    %v145 = vld [vmem:[#allocation2 + $0x300] sm:$0xff]
    %v146 = vld [vmem:[#allocation2 + $0x308] sm:$0xff]
    %v147 = vld [vmem:[#allocation2 + $0x310] sm:$0xff]
    %v148 = vld [vmem:[#allocation2 + $0x318] sm:$0xff]
    %v149 = vld [vmem:[#allocation2 + $0x320] sm:$0xff]
    %v150 = vld [vmem:[#allocation2 + $0x328] sm:$0xff]
    %v151 = vld [vmem:[#allocation2 + $0x330] sm:$0xff]
    %v152 = vld [vmem:[#allocation2 + $0x338] sm:$0xff]
    %v153 = vld [vmem:[#allocation2 + $0x340] sm:$0xff]
    %v154 = vld [vmem:[#allocation2 + $0x348] sm:$0xff]
    %v155 = vld [vmem:[#allocation2 + $0x350] sm:$0xff]
    %v156 = vld [vmem:[#allocation2 + $0x358] sm:$0xff]
    %v157 = vld [vmem:[#allocation2 + $0x360] sm:$0xff]
    %v158 = vld [vmem:[#allocation2 + $0x368] sm:$0xff]
    %v159 = vld [vmem:[#allocation2 + $0x370] sm:$0xff]
    %v160 = vld [vmem:[#allocation2 + $0x378] sm:$0xff]
    %v161 = vld [vmem:[#allocation2 + $0x380] sm:$0xff]
    %v162 = vld [vmem:[#allocation2 + $0x388] sm:$0xff]
    %v163 = vld [vmem:[#allocation2 + $0x390] sm:$0xff]
    %v164 = vld [vmem:[#allocation2 + $0x398] sm:$0xff]
    %v165 = vld [vmem:[#allocation2 + $0x3a0] sm:$0xff]
    %v166 = vld [vmem:[#allocation2 + $0x3a8] sm:$0xff]
    %v167 = vld [vmem:[#allocation2 + $0x3b0] sm:$0xff]
    %v168 = vld [vmem:[#allocation2 + $0x3b8] sm:$0xff]
    %v169 = vld [vmem:[#allocation2 + $0x3c0] sm:$0xff]
    %v170 = vld [vmem:[#allocation2 + $0x3c8] sm:$0xff]
    %v171 = vld [vmem:[#allocation2 + $0x3d0] sm:$0xff]
    %v172 = vld [vmem:[#allocation2 + $0x3d8] sm:$0xff]
    %v173 = vld [vmem:[#allocation2 + $0x3e0] sm:$0xff]
    %v174 = vld [vmem:[#allocation2 + $0x3e8] sm:$0xff]
    %v175 = vld [vmem:[#allocation2 + $0x3f0] sm:$0xff]
    %v176 = vld [vmem:[#allocation2 + $0x3f8] sm:$0xff]
    %v177 = vld [vmem:[#allocation2 + $0x400] sm:$0xff]
    %v178 = vld [vmem:[#allocation2 + $0x408] sm:$0xff]
    %v179 = vld [vmem:[#allocation2 + $0x410] sm:$0xff]
    %v180 = vld [vmem:[#allocation2 + $0x418] sm:$0xff]
    %v181 = vld [vmem:[#allocation2 + $0x420] sm:$0xff]
    %v182 = vld [vmem:[#allocation2 + $0x428] sm:$0xff]
    %v183 = vld [vmem:[#allocation2 + $0x430] sm:$0xff]
    %v184 = vld [vmem:[#allocation2 + $0x438] sm:$0xff]
    %v185 = vld [vmem:[#allocation2 + $0x440] sm:$0xff]
    %v186 = vld [vmem:[#allocation2 + $0x448] sm:$0xff]
    %v187 = vld [vmem:[#allocation2 + $0x450] sm:$0xff]
    %v188 = vld [vmem:[#allocation2 + $0x458] sm:$0xff]
    %v189 = vld [vmem:[#allocation2 + $0x460] sm:$0xff]
    %v190 = vld [vmem:[#allocation2 + $0x468] sm:$0xff]
    %v191 = vld [vmem:[#allocation2 + $0x470] sm:$0xff]
    %v192 = vld [vmem:[#allocation2 + $0x478] sm:$0xff]
    %v193 = vld [vmem:[#allocation2 + $0x480] sm:$0xff]
    %v194 = vld [vmem:[#allocation2 + $0x488] sm:$0xff]
    %v195 = vld [vmem:[#allocation2 + $0x490] sm:$0xff]
    %v196 = vld [vmem:[#allocation2 + $0x498] sm:$0xff]
    %v197 = vld [vmem:[#allocation2 + $0x4a0] sm:$0xff]
    %v198 = vld [vmem:[#allocation2 + $0x4a8] sm:$0xff]
    %v199 = vld [vmem:[#allocation2 + $0x4b0] sm:$0xff]
    %v200 = vld [vmem:[#allocation2 + $0x4b8] sm:$0xff]
    %v201 = vld [vmem:[#allocation2 + $0x4c0] sm:$0xff]
    %v202 = vld [vmem:[#allocation2 + $0x4c8] sm:$0xff]
    %v203 = vld [vmem:[#allocation2 + $0x4d0] sm:$0xff]
    %v204 = vld [vmem:[#allocation2 + $0x4d8] sm:$0xff]
    %v205 = vld [vmem:[#allocation2 + $0x4e0] sm:$0xff]
    %v206 = vld [vmem:[#allocation2 + $0x4e8] sm:$0xff]
    %v207 = vld [vmem:[#allocation2 + $0x4f0] sm:$0xff]
    %v208 = vld [vmem:[#allocation2 + $0x4f8] sm:$0xff]
    %v209 = vld [vmem:[#allocation2 + $0x500] sm:$0xff]
    %v210 = vld [vmem:[#allocation2 + $0x508] sm:$0xff]
    %v211 = vld [vmem:[#allocation2 + $0x510] sm:$0xff]
    %v212 = vld [vmem:[#allocation2 + $0x518] sm:$0xff]
    %v213 = vld [vmem:[#allocation2 + $0x520] sm:$0xff]
    %v214 = vld [vmem:[#allocation2 + $0x528] sm:$0xff]
    %v215 = vld [vmem:[#allocation2 + $0x530] sm:$0xff]
    %v216 = vld [vmem:[#allocation2 + $0x538] sm:$0xff]
    %v217 = vld [vmem:[#allocation2 + $0x540] sm:$0xff]
    %v218 = vld [vmem:[#allocation2 + $0x548] sm:$0xff]
    %v219 = vld [vmem:[#allocation2 + $0x550] sm:$0xff]
    %v220 = vld [vmem:[#allocation2 + $0x558] sm:$0xff]
    %v221 = vld [vmem:[#allocation2 + $0x560] sm:$0xff]
    %v222 = vld [vmem:[#allocation2 + $0x568] sm:$0xff]
    %v223 = vld [vmem:[#allocation2 + $0x570] sm:$0xff]
    %v224 = vld [vmem:[#allocation2 + $0x578] sm:$0xff]
    %v225 = vld [vmem:[#allocation2 + $0x580] sm:$0xff]
    %v226 = vld [vmem:[#allocation2 + $0x588] sm:$0xff]
    %v227 = vld [vmem:[#allocation2 + $0x590] sm:$0xff]
    %v228 = vld [vmem:[#allocation2 + $0x598] sm:$0xff]
    %v229 = vld [vmem:[#allocation2 + $0x5a0] sm:$0xff]
    %v230 = vld [vmem:[#allocation2 + $0x5a8] sm:$0xff]
    %v231 = vld [vmem:[#allocation2 + $0x5b0] sm:$0xff]
    %v232 = vld [vmem:[#allocation2 + $0x5b8] sm:$0xff]
    %v233 = vld [vmem:[#allocation2 + $0x5c0] sm:$0xff]
    %v234 = vld [vmem:[#allocation2 + $0x5c8] sm:$0xff]
    %v235 = vld [vmem:[#allocation2 + $0x5d0] sm:$0xff]
    %v236 = vld [vmem:[#allocation2 + $0x5d8] sm:$0xff]
    %v237 = vld [vmem:[#allocation2 + $0x5e0] sm:$0xff]
    %v238 = vld [vmem:[#allocation2 + $0x5e8] sm:$0xff]
    %v239 = vld [vmem:[#allocation2 + $0x5f0] sm:$0xff]
    %v240 = vld [vmem:[#allocation2 + $0x5f8] sm:$0xff]
    %v241 = vld [vmem:[#allocation2 + $0x600] sm:$0xff]
    %v242 = vld [vmem:[#allocation2 + $0x608] sm:$0xff]
    %v243 = vld [vmem:[#allocation2 + $0x610] sm:$0xff]
    %v244 = vld [vmem:[#allocation2 + $0x618] sm:$0xff]
    %v245 = vld [vmem:[#allocation2 + $0x620] sm:$0xff]
    %v246 = vld [vmem:[#allocation2 + $0x628] sm:$0xff]
    %v247 = vld [vmem:[#allocation2 + $0x630] sm:$0xff]
    %v248 = vld [vmem:[#allocation2 + $0x638] sm:$0xff]
    %v249 = vld [vmem:[#allocation2 + $0x640] sm:$0xff]
    %v250 = vld [vmem:[#allocation2 + $0x648] sm:$0xff]
    %v251 = vld [vmem:[#allocation2 + $0x650] sm:$0xff]
    %v252 = vld [vmem:[#allocation2 + $0x658] sm:$0xff]
    %v253 = vld [vmem:[#allocation2 + $0x660] sm:$0xff]
    %v254 = vld [vmem:[#allocation2 + $0x668] sm:$0xff]
    %v255 = vld [vmem:[#allocation2 + $0x670] sm:$0xff]
    %v256 = vld [vmem:[#allocation2 + $0x678] sm:$0xff]
    %v257 = vld [vmem:[#allocation2 + $0x680] sm:$0xff]
    %v258 = vld [vmem:[#allocation2 + $0x688] sm:$0xff]
    %v259 = vld [vmem:[#allocation2 + $0x690] sm:$0xff]
    %v260 = vld [vmem:[#allocation2 + $0x698] sm:$0xff]
    %v261 = vld [vmem:[#allocation2 + $0x6a0] sm:$0xff]
    %v262 = vld [vmem:[#allocation2 + $0x6a8] sm:$0xff]
    %v263 = vld [vmem:[#allocation2 + $0x6b0] sm:$0xff]
    %v264 = vld [vmem:[#allocation2 + $0x6b8] sm:$0xff]
    %v265 = vld [vmem:[#allocation2 + $0x6c0] sm:$0xff]
    %v266 = vld [vmem:[#allocation2 + $0x6c8] sm:$0xff]
    %v267 = vld [vmem:[#allocation2 + $0x6d0] sm:$0xff]
    %v268 = vld [vmem:[#allocation2 + $0x6d8] sm:$0xff]
    %v269 = vld [vmem:[#allocation2 + $0x6e0] sm:$0xff]
    %v270 = vld [vmem:[#allocation2 + $0x6e8] sm:$0xff]
    %v271 = vld [vmem:[#allocation2 + $0x6f0] sm:$0xff]
    %v272 = vld [vmem:[#allocation2 + $0x6f8] sm:$0xff]
    %v273 = vld [vmem:[#allocation2 + $0x700] sm:$0xff]
    %v274 = vld [vmem:[#allocation2 + $0x708] sm:$0xff]
    %v275 = vld [vmem:[#allocation2 + $0x710] sm:$0xff]
    %v276 = vld [vmem:[#allocation2 + $0x718] sm:$0xff]
    %v277 = vld [vmem:[#allocation2 + $0x720] sm:$0xff]
    %v278 = vld [vmem:[#allocation2 + $0x728] sm:$0xff]
    %v279 = vld [vmem:[#allocation2 + $0x730] sm:$0xff]
    %v280 = vld [vmem:[#allocation2 + $0x738] sm:$0xff]
    %v281 = vld [vmem:[#allocation2 + $0x740] sm:$0xff]
    %v282 = vld [vmem:[#allocation2 + $0x748] sm:$0xff]
    %v283 = vld [vmem:[#allocation2 + $0x750] sm:$0xff]
    %v284 = vld [vmem:[#allocation2 + $0x758] sm:$0xff]
    %v285 = vld [vmem:[#allocation2 + $0x760] sm:$0xff]
    %v286 = vld [vmem:[#allocation2 + $0x768] sm:$0xff]
    %v287 = vld [vmem:[#allocation2 + $0x770] sm:$0xff]
    %v288 = vld [vmem:[#allocation2 + $0x778] sm:$0xff]
    %v289 = vld [vmem:[#allocation2 + $0x780] sm:$0xff]
    %v290 = vld [vmem:[#allocation2 + $0x788] sm:$0xff]
    %v291 = vld [vmem:[#allocation2 + $0x790] sm:$0xff]
    %v292 = vld [vmem:[#allocation2 + $0x798] sm:$0xff]
    %v293 = vld [vmem:[#allocation2 + $0x7a0] sm:$0xff]
    %v294 = vld [vmem:[#allocation2 + $0x7a8] sm:$0xff]
    %v295 = vld [vmem:[#allocation2 + $0x7b0] sm:$0xff]
    %v296 = vld [vmem:[#allocation2 + $0x7b8] sm:$0xff]
    %v297 = vld [vmem:[#allocation2 + $0x7c0] sm:$0xff]
    %v298 = vld [vmem:[#allocation2 + $0x7c8] sm:$0xff]
    %v299 = vld [vmem:[#allocation2 + $0x7d0] sm:$0xff]
    %v300 = vld [vmem:[#allocation2 + $0x7d8] sm:$0xff]
    %v301 = vld [vmem:[#allocation2 + $0x7e0] sm:$0xff]
    %v302 = vld [vmem:[#allocation2 + $0x7e8] sm:$0xff]
    %v303 = vld [vmem:[#allocation2 + $0x7f0] sm:$0xff]
    %v304 = vld [vmem:[#allocation2 + $0x7f8] sm:$0xff]
    %v305 = vld [vmem:[%s3] sm:$0xff]
    %v306 = vld [vmem:[%s3 + $0x8] sm:$0xff]
    %v309 = vlaneseq
    %v310 = vshrl.u32 %v309, 7
    %v311 = vsub.s32 0, %v310
    %v312 = vrot.slane %v305, %v311
    %v313 = vlaneseq
    %v314 = vshrl.u32 %v313, 7
    %v315 = vsub.s32 1, %v314
    %v316 = vrot.slane %v305, %v315
    %v317 = vlaneseq
    %v318 = vshrl.u32 %v317, 7
    %v319 = vsub.s32 2, %v318
    %v320 = vrot.slane %v305, %v319
    %v321 = vlaneseq
    %v322 = vshrl.u32 %v321, 7
    %v323 = vsub.s32 3, %v322
    %v324 = vrot.slane %v305, %v323
    %v325 = vlaneseq
    %v326 = vshrl.u32 %v325, 7
    %v327 = vsub.s32 4, %v326
    %v328 = vrot.slane %v305, %v327
    %v329 = vlaneseq
    %v330 = vshrl.u32 %v329, 7
    %v331 = vsub.s32 5, %v330
    %v332 = vrot.slane %v305, %v331
    %v333 = vlaneseq
    %v334 = vshrl.u32 %v333, 7
    %v335 = vsub.s32 6, %v334
    %v336 = vrot.slane %v305, %v335
    %v337 = vlaneseq
    %v338 = vshrl.u32 %v337, 7
    %v339 = vsub.s32 7, %v338
    %v340 = vrot.slane %v305, %v339
    %v341 = vlaneseq
    %v342 = vshrl.u32 %v341, 7
    %v343 = vsub.s32 0, %v342
    %v344 = vrot.slane %v306, %v343
    %v345 = vlaneseq
    %v346 = vshrl.u32 %v345, 7
    %v347 = vsub.s32 1, %v346
    %v348 = vrot.slane %v306, %v347
    %v349 = vlaneseq
    %v350 = vshrl.u32 %v349, 7
    %v351 = vsub.s32 2, %v350
    %v352 = vrot.slane %v306, %v351
    %v353 = vlaneseq
    %v354 = vshrl.u32 %v353, 7
    %v355 = vsub.s32 3, %v354
    %v356 = vrot.slane %v306, %v355
    %v357 = vlaneseq
    %v358 = vshrl.u32 %v357, 7
    %v359 = vsub.s32 4, %v358
    %v360 = vrot.slane %v306, %v359
    %v361 = vlaneseq
    %v362 = vshrl.u32 %v361, 7
    %v363 = vsub.s32 5, %v362
    %v364 = vrot.slane %v306, %v363
    %v365 = vlaneseq
    %v366 = vshrl.u32 %v365, 7
    %v367 = vsub.s32 6, %v366
    %v368 = vrot.slane %v306, %v367
    %v369 = vlaneseq
    %v370 = vshrl.u32 %v369, 7
    %v371 = vsub.s32 7, %v370
    %v372 = vrot.slane %v306, %v371
    %v391 = vunpack.c.l.b16 %v47
    %v392 = vunpack.c.h.b16 %v47
    %v393 = vunpack.c.l.b16 %v48
    %v394 = vunpack.c.h.b16 %v48
    %v395 = vpack.c.b16 %v393, %v391
    %v396 = vpack.c.b16 %v394, %v392
    %v655 = vunpack.c.l.b16 %v49
    %v656 = vunpack.c.h.b16 %v49
    %v657 = vunpack.c.l.b16 %v50
    %v658 = vunpack.c.h.b16 %v50
    %v659 = vunpack.c.l.b16 %v51
    %v660 = vunpack.c.h.b16 %v51
    %v661 = vunpack.c.l.b16 %v52
    %v662 = vunpack.c.h.b16 %v52
    %v663 = vunpack.c.l.b16 %v53
    %v664 = vunpack.c.h.b16 %v53
    %v665 = vunpack.c.l.b16 %v54
    %v666 = vunpack.c.h.b16 %v54
    %v667 = vunpack.c.l.b16 %v55
    %v668 = vunpack.c.h.b16 %v55
    %v669 = vunpack.c.l.b16 %v56
    %v670 = vunpack.c.h.b16 %v56
    %v671 = vunpack.c.l.b16 %v57
    %v672 = vunpack.c.h.b16 %v57
    %v673 = vunpack.c.l.b16 %v58
    %v674 = vunpack.c.h.b16 %v58
    %v675 = vunpack.c.l.b16 %v59
    %v676 = vunpack.c.h.b16 %v59
    %v677 = vunpack.c.l.b16 %v60
    %v678 = vunpack.c.h.b16 %v60
    %v679 = vunpack.c.l.b16 %v61
    %v680 = vunpack.c.h.b16 %v61
    %v681 = vunpack.c.l.b16 %v62
    %v682 = vunpack.c.h.b16 %v62
    %v683 = vunpack.c.l.b16 %v63
    %v684 = vunpack.c.h.b16 %v63
    %v685 = vunpack.c.l.b16 %v64
    %v686 = vunpack.c.h.b16 %v64
    %v687 = vunpack.c.l.b16 %v65
    %v688 = vunpack.c.h.b16 %v65
    %v689 = vunpack.c.l.b16 %v66
    %v690 = vunpack.c.h.b16 %v66
    %v691 = vunpack.c.l.b16 %v67
    %v692 = vunpack.c.h.b16 %v67
    %v693 = vunpack.c.l.b16 %v68
    %v694 = vunpack.c.h.b16 %v68
    %v695 = vunpack.c.l.b16 %v69
    %v696 = vunpack.c.h.b16 %v69
    %v697 = vunpack.c.l.b16 %v70
    %v698 = vunpack.c.h.b16 %v70
    %v699 = vunpack.c.l.b16 %v71
    %v700 = vunpack.c.h.b16 %v71
    %v701 = vunpack.c.l.b16 %v72
    %v702 = vunpack.c.h.b16 %v72
    %v703 = vunpack.c.l.b16 %v73
    %v704 = vunpack.c.h.b16 %v73
    %v705 = vunpack.c.l.b16 %v74
    %v706 = vunpack.c.h.b16 %v74
    %v707 = vunpack.c.l.b16 %v75
    %v708 = vunpack.c.h.b16 %v75
    %v709 = vunpack.c.l.b16 %v76
    %v710 = vunpack.c.h.b16 %v76
    %v711 = vunpack.c.l.b16 %v77
    %v712 = vunpack.c.h.b16 %v77
    %v713 = vunpack.c.l.b16 %v78
    %v714 = vunpack.c.h.b16 %v78
    %v715 = vunpack.c.l.b16 %v79
    %v716 = vunpack.c.h.b16 %v79
    %v717 = vunpack.c.l.b16 %v80
    %v718 = vunpack.c.h.b16 %v80
    %v719 = vunpack.c.l.b16 %v81
    %v720 = vunpack.c.h.b16 %v81
    %v721 = vunpack.c.l.b16 %v82
    %v722 = vunpack.c.h.b16 %v82
    %v723 = vunpack.c.l.b16 %v83
    %v724 = vunpack.c.h.b16 %v83
    %v725 = vunpack.c.l.b16 %v84
    %v726 = vunpack.c.h.b16 %v84
    %v727 = vunpack.c.l.b16 %v85
    %v728 = vunpack.c.h.b16 %v85
    %v729 = vunpack.c.l.b16 %v86
    %v730 = vunpack.c.h.b16 %v86
    %v731 = vunpack.c.l.b16 %v87
    %v732 = vunpack.c.h.b16 %v87
    %v733 = vunpack.c.l.b16 %v88
    %v734 = vunpack.c.h.b16 %v88
    %v735 = vunpack.c.l.b16 %v89
    %v736 = vunpack.c.h.b16 %v89
    %v737 = vunpack.c.l.b16 %v90
    %v738 = vunpack.c.h.b16 %v90
    %v739 = vunpack.c.l.b16 %v91
    %v740 = vunpack.c.h.b16 %v91
    %v741 = vunpack.c.l.b16 %v92
    %v742 = vunpack.c.h.b16 %v92
    %v743 = vunpack.c.l.b16 %v93
    %v744 = vunpack.c.h.b16 %v93
    %v745 = vunpack.c.l.b16 %v94
    %v746 = vunpack.c.h.b16 %v94
    %v747 = vunpack.c.l.b16 %v95
    %v748 = vunpack.c.h.b16 %v95
    %v749 = vunpack.c.l.b16 %v96
    %v750 = vunpack.c.h.b16 %v96
    %v751 = vunpack.c.l.b16 %v97
    %v752 = vunpack.c.h.b16 %v97
    %v753 = vunpack.c.l.b16 %v98
    %v754 = vunpack.c.h.b16 %v98
    %v755 = vunpack.c.l.b16 %v99
    %v756 = vunpack.c.h.b16 %v99
    %v757 = vunpack.c.l.b16 %v100
    %v758 = vunpack.c.h.b16 %v100
    %v759 = vunpack.c.l.b16 %v101
    %v760 = vunpack.c.h.b16 %v101
    %v761 = vunpack.c.l.b16 %v102
    %v762 = vunpack.c.h.b16 %v102
    %v763 = vunpack.c.l.b16 %v103
    %v764 = vunpack.c.h.b16 %v103
    %v765 = vunpack.c.l.b16 %v104
    %v766 = vunpack.c.h.b16 %v104
    %v767 = vunpack.c.l.b16 %v105
    %v768 = vunpack.c.h.b16 %v105
    %v769 = vunpack.c.l.b16 %v106
    %v770 = vunpack.c.h.b16 %v106
    %v771 = vunpack.c.l.b16 %v107
    %v772 = vunpack.c.h.b16 %v107
    %v773 = vunpack.c.l.b16 %v108
    %v774 = vunpack.c.h.b16 %v108
    %v775 = vunpack.c.l.b16 %v109
    %v776 = vunpack.c.h.b16 %v109
    %v777 = vunpack.c.l.b16 %v110
    %v778 = vunpack.c.h.b16 %v110
    %v779 = vunpack.c.l.b16 %v111
    %v780 = vunpack.c.h.b16 %v111
    %v781 = vunpack.c.l.b16 %v112
    %v782 = vunpack.c.h.b16 %v112
    %v783 = vunpack.c.l.b16 %v113
    %v784 = vunpack.c.h.b16 %v113
    %v785 = vunpack.c.l.b16 %v114
    %v786 = vunpack.c.h.b16 %v114
    %v787 = vunpack.c.l.b16 %v115
    %v788 = vunpack.c.h.b16 %v115
    %v789 = vunpack.c.l.b16 %v116
    %v790 = vunpack.c.h.b16 %v116
    %v791 = vunpack.c.l.b16 %v117
    %v792 = vunpack.c.h.b16 %v117
    %v793 = vunpack.c.l.b16 %v118
    %v794 = vunpack.c.h.b16 %v118
    %v795 = vunpack.c.l.b16 %v119
    %v796 = vunpack.c.h.b16 %v119
    %v797 = vunpack.c.l.b16 %v120
    %v798 = vunpack.c.h.b16 %v120
    %v799 = vunpack.c.l.b16 %v121
    %v800 = vunpack.c.h.b16 %v121
    %v801 = vunpack.c.l.b16 %v122
    %v802 = vunpack.c.h.b16 %v122
    %v803 = vunpack.c.l.b16 %v123
    %v804 = vunpack.c.h.b16 %v123
    %v805 = vunpack.c.l.b16 %v124
    %v806 = vunpack.c.h.b16 %v124
    %v807 = vunpack.c.l.b16 %v125
    %v808 = vunpack.c.h.b16 %v125
    %v809 = vunpack.c.l.b16 %v126
    %v810 = vunpack.c.h.b16 %v126
    %v811 = vunpack.c.l.b16 %v127
    %v812 = vunpack.c.h.b16 %v127
    %v813 = vunpack.c.l.b16 %v128
    %v814 = vunpack.c.h.b16 %v128
    %v815 = vunpack.c.l.b16 %v129
    %v816 = vunpack.c.h.b16 %v129
    %v817 = vunpack.c.l.b16 %v130
    %v818 = vunpack.c.h.b16 %v130
    %v819 = vunpack.c.l.b16 %v131
    %v820 = vunpack.c.h.b16 %v131
    %v821 = vunpack.c.l.b16 %v132
    %v822 = vunpack.c.h.b16 %v132
    %v823 = vunpack.c.l.b16 %v133
    %v824 = vunpack.c.h.b16 %v133
    %v825 = vunpack.c.l.b16 %v134
    %v826 = vunpack.c.h.b16 %v134
    %v827 = vunpack.c.l.b16 %v135
    %v828 = vunpack.c.h.b16 %v135
    %v829 = vunpack.c.l.b16 %v136
    %v830 = vunpack.c.h.b16 %v136
    %v831 = vunpack.c.l.b16 %v137
    %v832 = vunpack.c.h.b16 %v137
    %v833 = vunpack.c.l.b16 %v138
    %v834 = vunpack.c.h.b16 %v138
    %v835 = vunpack.c.l.b16 %v139
    %v836 = vunpack.c.h.b16 %v139
    %v837 = vunpack.c.l.b16 %v140
    %v838 = vunpack.c.h.b16 %v140
    %v839 = vunpack.c.l.b16 %v141
    %v840 = vunpack.c.h.b16 %v141
    %v841 = vunpack.c.l.b16 %v142
    %v842 = vunpack.c.h.b16 %v142
    %v843 = vunpack.c.l.b16 %v143
    %v844 = vunpack.c.h.b16 %v143
    %v845 = vunpack.c.l.b16 %v144
    %v846 = vunpack.c.h.b16 %v144
    %v847 = vunpack.c.l.b16 %v145
    %v848 = vunpack.c.h.b16 %v145
    %v849 = vunpack.c.l.b16 %v146
    %v850 = vunpack.c.h.b16 %v146
    %v851 = vunpack.c.l.b16 %v147
    %v852 = vunpack.c.h.b16 %v147
    %v853 = vunpack.c.l.b16 %v148
    %v854 = vunpack.c.h.b16 %v148
    %v855 = vunpack.c.l.b16 %v149
    %v856 = vunpack.c.h.b16 %v149
    %v857 = vunpack.c.l.b16 %v150
    %v858 = vunpack.c.h.b16 %v150
    %v859 = vunpack.c.l.b16 %v151
    %v860 = vunpack.c.h.b16 %v151
    %v861 = vunpack.c.l.b16 %v152
    %v862 = vunpack.c.h.b16 %v152
    %v863 = vunpack.c.l.b16 %v153
    %v864 = vunpack.c.h.b16 %v153
    %v865 = vunpack.c.l.b16 %v154
    %v866 = vunpack.c.h.b16 %v154
    %v867 = vunpack.c.l.b16 %v155
    %v868 = vunpack.c.h.b16 %v155
    %v869 = vunpack.c.l.b16 %v156
    %v870 = vunpack.c.h.b16 %v156
    %v871 = vunpack.c.l.b16 %v157
    %v872 = vunpack.c.h.b16 %v157
    %v873 = vunpack.c.l.b16 %v158
    %v874 = vunpack.c.h.b16 %v158
    %v875 = vunpack.c.l.b16 %v159
    %v876 = vunpack.c.h.b16 %v159
    %v877 = vunpack.c.l.b16 %v160
    %v878 = vunpack.c.h.b16 %v160
    %v879 = vunpack.c.l.b16 %v161
    %v880 = vunpack.c.h.b16 %v161
    %v881 = vunpack.c.l.b16 %v162
    %v882 = vunpack.c.h.b16 %v162
    %v883 = vunpack.c.l.b16 %v163
    %v884 = vunpack.c.h.b16 %v163
    %v885 = vunpack.c.l.b16 %v164
    %v886 = vunpack.c.h.b16 %v164
    %v887 = vunpack.c.l.b16 %v165
    %v888 = vunpack.c.h.b16 %v165
    %v889 = vunpack.c.l.b16 %v166
    %v890 = vunpack.c.h.b16 %v166
    %v891 = vunpack.c.l.b16 %v167
    %v892 = vunpack.c.h.b16 %v167
    %v893 = vunpack.c.l.b16 %v168
    %v894 = vunpack.c.h.b16 %v168
    %v895 = vunpack.c.l.b16 %v169
    %v896 = vunpack.c.h.b16 %v169
    %v897 = vunpack.c.l.b16 %v170
    %v898 = vunpack.c.h.b16 %v170
    %v899 = vunpack.c.l.b16 %v171
    %v900 = vunpack.c.h.b16 %v171
    %v901 = vunpack.c.l.b16 %v172
    %v902 = vunpack.c.h.b16 %v172
    %v903 = vunpack.c.l.b16 %v173
    %v904 = vunpack.c.h.b16 %v173
    %v905 = vunpack.c.l.b16 %v174
    %v906 = vunpack.c.h.b16 %v174
    %v907 = vunpack.c.l.b16 %v175
    %v908 = vunpack.c.h.b16 %v175
    %v909 = vunpack.c.l.b16 %v176
    %v910 = vunpack.c.h.b16 %v176
    %v911 = vunpack.c.l.b16 %v177
    %v912 = vunpack.c.h.b16 %v177
    %v913 = vunpack.c.l.b16 %v178
    %v914 = vunpack.c.h.b16 %v178
    %v915 = vunpack.c.l.b16 %v179
    %v916 = vunpack.c.h.b16 %v179
    %v917 = vunpack.c.l.b16 %v180
    %v918 = vunpack.c.h.b16 %v180
    %v919 = vunpack.c.l.b16 %v181
    %v920 = vunpack.c.h.b16 %v181
    %v921 = vunpack.c.l.b16 %v182
    %v922 = vunpack.c.h.b16 %v182
    %v923 = vunpack.c.l.b16 %v183
    %v924 = vunpack.c.h.b16 %v183
    %v925 = vunpack.c.l.b16 %v184
    %v926 = vunpack.c.h.b16 %v184
    %v927 = vunpack.c.l.b16 %v185
    %v928 = vunpack.c.h.b16 %v185
    %v929 = vunpack.c.l.b16 %v186
    %v930 = vunpack.c.h.b16 %v186
    %v931 = vunpack.c.l.b16 %v187
    %v932 = vunpack.c.h.b16 %v187
    %v933 = vunpack.c.l.b16 %v188
    %v934 = vunpack.c.h.b16 %v188
    %v935 = vunpack.c.l.b16 %v189
    %v936 = vunpack.c.h.b16 %v189
    %v937 = vunpack.c.l.b16 %v190
    %v938 = vunpack.c.h.b16 %v190
    %v939 = vunpack.c.l.b16 %v191
    %v940 = vunpack.c.h.b16 %v191
    %v941 = vunpack.c.l.b16 %v192
    %v942 = vunpack.c.h.b16 %v192
    %v943 = vunpack.c.l.b16 %v193
    %v944 = vunpack.c.h.b16 %v193
    %v945 = vunpack.c.l.b16 %v194
    %v946 = vunpack.c.h.b16 %v194
    %v947 = vunpack.c.l.b16 %v195
    %v948 = vunpack.c.h.b16 %v195
    %v949 = vunpack.c.l.b16 %v196
    %v950 = vunpack.c.h.b16 %v196
    %v951 = vunpack.c.l.b16 %v197
    %v952 = vunpack.c.h.b16 %v197
    %v953 = vunpack.c.l.b16 %v198
    %v954 = vunpack.c.h.b16 %v198
    %v955 = vunpack.c.l.b16 %v199
    %v956 = vunpack.c.h.b16 %v199
    %v957 = vunpack.c.l.b16 %v200
    %v958 = vunpack.c.h.b16 %v200
    %v959 = vunpack.c.l.b16 %v201
    %v960 = vunpack.c.h.b16 %v201
    %v961 = vunpack.c.l.b16 %v202
    %v962 = vunpack.c.h.b16 %v202
    %v963 = vunpack.c.l.b16 %v203
    %v964 = vunpack.c.h.b16 %v203
    %v965 = vunpack.c.l.b16 %v204
    %v966 = vunpack.c.h.b16 %v204
    %v967 = vunpack.c.l.b16 %v205
    %v968 = vunpack.c.h.b16 %v205
    %v969 = vunpack.c.l.b16 %v206
    %v970 = vunpack.c.h.b16 %v206
    %v971 = vunpack.c.l.b16 %v207
    %v972 = vunpack.c.h.b16 %v207
    %v973 = vunpack.c.l.b16 %v208
    %v974 = vunpack.c.h.b16 %v208
    %v975 = vunpack.c.l.b16 %v209
    %v976 = vunpack.c.h.b16 %v209
    %v977 = vunpack.c.l.b16 %v210
    %v978 = vunpack.c.h.b16 %v210
    %v979 = vunpack.c.l.b16 %v211
    %v980 = vunpack.c.h.b16 %v211
    %v981 = vunpack.c.l.b16 %v212
    %v982 = vunpack.c.h.b16 %v212
    %v983 = vunpack.c.l.b16 %v213
    %v984 = vunpack.c.h.b16 %v213
    %v985 = vunpack.c.l.b16 %v214
    %v986 = vunpack.c.h.b16 %v214
    %v987 = vunpack.c.l.b16 %v215
    %v988 = vunpack.c.h.b16 %v215
    %v989 = vunpack.c.l.b16 %v216
    %v990 = vunpack.c.h.b16 %v216
    %v991 = vunpack.c.l.b16 %v217
    %v992 = vunpack.c.h.b16 %v217
    %v993 = vunpack.c.l.b16 %v218
    %v994 = vunpack.c.h.b16 %v218
    %v995 = vunpack.c.l.b16 %v219
    %v996 = vunpack.c.h.b16 %v219
    %v997 = vunpack.c.l.b16 %v220
    %v998 = vunpack.c.h.b16 %v220
    %v999 = vunpack.c.l.b16 %v221
    %v1000 = vunpack.c.h.b16 %v221
    %v1001 = vunpack.c.l.b16 %v222
    %v1002 = vunpack.c.h.b16 %v222
    %v1003 = vunpack.c.l.b16 %v223
    %v1004 = vunpack.c.h.b16 %v223
    %v1005 = vunpack.c.l.b16 %v224
    %v1006 = vunpack.c.h.b16 %v224
    %v1007 = vunpack.c.l.b16 %v225
    %v1008 = vunpack.c.h.b16 %v225
    %v1009 = vunpack.c.l.b16 %v226
    %v1010 = vunpack.c.h.b16 %v226
    %v1011 = vunpack.c.l.b16 %v227
    %v1012 = vunpack.c.h.b16 %v227
    %v1013 = vunpack.c.l.b16 %v228
    %v1014 = vunpack.c.h.b16 %v228
    %v1015 = vunpack.c.l.b16 %v229
    %v1016 = vunpack.c.h.b16 %v229
    %v1017 = vunpack.c.l.b16 %v230
    %v1018 = vunpack.c.h.b16 %v230
    %v1019 = vunpack.c.l.b16 %v231
    %v1020 = vunpack.c.h.b16 %v231
    %v1021 = vunpack.c.l.b16 %v232
    %v1022 = vunpack.c.h.b16 %v232
    %v1023 = vunpack.c.l.b16 %v233
    %v1024 = vunpack.c.h.b16 %v233
    %v1025 = vunpack.c.l.b16 %v234
    %v1026 = vunpack.c.h.b16 %v234
    %v1027 = vunpack.c.l.b16 %v235
    %v1028 = vunpack.c.h.b16 %v235
    %v1029 = vunpack.c.l.b16 %v236
    %v1030 = vunpack.c.h.b16 %v236
    %v1031 = vunpack.c.l.b16 %v237
    %v1032 = vunpack.c.h.b16 %v237
    %v1033 = vunpack.c.l.b16 %v238
    %v1034 = vunpack.c.h.b16 %v238
    %v1035 = vunpack.c.l.b16 %v239
    %v1036 = vunpack.c.h.b16 %v239
    %v1037 = vunpack.c.l.b16 %v240
    %v1038 = vunpack.c.h.b16 %v240
    %v1039 = vunpack.c.l.b16 %v241
    %v1040 = vunpack.c.h.b16 %v241
    %v1041 = vunpack.c.l.b16 %v242
    %v1042 = vunpack.c.h.b16 %v242
    %v1043 = vunpack.c.l.b16 %v243
    %v1044 = vunpack.c.h.b16 %v243
    %v1045 = vunpack.c.l.b16 %v244
    %v1046 = vunpack.c.h.b16 %v244
    %v1047 = vunpack.c.l.b16 %v245
    %v1048 = vunpack.c.h.b16 %v245
    %v1049 = vunpack.c.l.b16 %v246
    %v1050 = vunpack.c.h.b16 %v246
    %v1051 = vunpack.c.l.b16 %v247
    %v1052 = vunpack.c.h.b16 %v247
    %v1053 = vunpack.c.l.b16 %v248
    %v1054 = vunpack.c.h.b16 %v248
    %v1055 = vunpack.c.l.b16 %v249
    %v1056 = vunpack.c.h.b16 %v249
    %v1057 = vunpack.c.l.b16 %v250
    %v1058 = vunpack.c.h.b16 %v250
    %v1059 = vunpack.c.l.b16 %v251
    %v1060 = vunpack.c.h.b16 %v251
    %v1061 = vunpack.c.l.b16 %v252
    %v1062 = vunpack.c.h.b16 %v252
    %v1063 = vunpack.c.l.b16 %v253
    %v1064 = vunpack.c.h.b16 %v253
    %v1065 = vunpack.c.l.b16 %v254
    %v1066 = vunpack.c.h.b16 %v254
    %v1067 = vunpack.c.l.b16 %v255
    %v1068 = vunpack.c.h.b16 %v255
    %v1069 = vunpack.c.l.b16 %v256
    %v1070 = vunpack.c.h.b16 %v256
    %v1071 = vunpack.c.l.b16 %v257
    %v1072 = vunpack.c.h.b16 %v257
    %v1073 = vunpack.c.l.b16 %v258
    %v1074 = vunpack.c.h.b16 %v258
    %v1075 = vunpack.c.l.b16 %v259
    %v1076 = vunpack.c.h.b16 %v259
    %v1077 = vunpack.c.l.b16 %v260
    %v1078 = vunpack.c.h.b16 %v260
    %v1079 = vunpack.c.l.b16 %v261
    %v1080 = vunpack.c.h.b16 %v261
    %v1081 = vunpack.c.l.b16 %v262
    %v1082 = vunpack.c.h.b16 %v262
    %v1083 = vunpack.c.l.b16 %v263
    %v1084 = vunpack.c.h.b16 %v263
    %v1085 = vunpack.c.l.b16 %v264
    %v1086 = vunpack.c.h.b16 %v264
    %v1087 = vunpack.c.l.b16 %v265
    %v1088 = vunpack.c.h.b16 %v265
    %v1089 = vunpack.c.l.b16 %v266
    %v1090 = vunpack.c.h.b16 %v266
    %v1091 = vunpack.c.l.b16 %v267
    %v1092 = vunpack.c.h.b16 %v267
    %v1093 = vunpack.c.l.b16 %v268
    %v1094 = vunpack.c.h.b16 %v268
    %v1095 = vunpack.c.l.b16 %v269
    %v1096 = vunpack.c.h.b16 %v269
    %v1097 = vunpack.c.l.b16 %v270
    %v1098 = vunpack.c.h.b16 %v270
    %v1099 = vunpack.c.l.b16 %v271
    %v1100 = vunpack.c.h.b16 %v271
    %v1101 = vunpack.c.l.b16 %v272
    %v1102 = vunpack.c.h.b16 %v272
    %v1103 = vunpack.c.l.b16 %v273
    %v1104 = vunpack.c.h.b16 %v273
    %v1105 = vunpack.c.l.b16 %v274
    %v1106 = vunpack.c.h.b16 %v274
    %v1107 = vunpack.c.l.b16 %v275
    %v1108 = vunpack.c.h.b16 %v275
    %v1109 = vunpack.c.l.b16 %v276
    %v1110 = vunpack.c.h.b16 %v276
    %v1111 = vunpack.c.l.b16 %v277
    %v1112 = vunpack.c.h.b16 %v277
    %v1113 = vunpack.c.l.b16 %v278
    %v1114 = vunpack.c.h.b16 %v278
    %v1115 = vunpack.c.l.b16 %v279
    %v1116 = vunpack.c.h.b16 %v279
    %v1117 = vunpack.c.l.b16 %v280
    %v1118 = vunpack.c.h.b16 %v280
    %v1119 = vunpack.c.l.b16 %v281
    %v1120 = vunpack.c.h.b16 %v281
    %v1121 = vunpack.c.l.b16 %v282
    %v1122 = vunpack.c.h.b16 %v282
    %v1123 = vunpack.c.l.b16 %v283
    %v1124 = vunpack.c.h.b16 %v283
    %v1125 = vunpack.c.l.b16 %v284
    %v1126 = vunpack.c.h.b16 %v284
    %v1127 = vunpack.c.l.b16 %v285
    %v1128 = vunpack.c.h.b16 %v285
    %v1129 = vunpack.c.l.b16 %v286
    %v1130 = vunpack.c.h.b16 %v286
    %v1131 = vunpack.c.l.b16 %v287
    %v1132 = vunpack.c.h.b16 %v287
    %v1133 = vunpack.c.l.b16 %v288
    %v1134 = vunpack.c.h.b16 %v288
    %v1135 = vunpack.c.l.b16 %v289
    %v1136 = vunpack.c.h.b16 %v289
    %v1137 = vunpack.c.l.b16 %v290
    %v1138 = vunpack.c.h.b16 %v290
    %v1139 = vunpack.c.l.b16 %v291
    %v1140 = vunpack.c.h.b16 %v291
    %v1141 = vunpack.c.l.b16 %v292
    %v1142 = vunpack.c.h.b16 %v292
    %v1143 = vunpack.c.l.b16 %v293
    %v1144 = vunpack.c.h.b16 %v293
    %v1145 = vunpack.c.l.b16 %v294
    %v1146 = vunpack.c.h.b16 %v294
    %v1147 = vunpack.c.l.b16 %v295
    %v1148 = vunpack.c.h.b16 %v295
    %v1149 = vunpack.c.l.b16 %v296
    %v1150 = vunpack.c.h.b16 %v296
    %v1151 = vunpack.c.l.b16 %v297
    %v1152 = vunpack.c.h.b16 %v297
    %v1153 = vunpack.c.l.b16 %v298
    %v1154 = vunpack.c.h.b16 %v298
    %v1155 = vunpack.c.l.b16 %v299
    %v1156 = vunpack.c.h.b16 %v299
    %v1157 = vunpack.c.l.b16 %v300
    %v1158 = vunpack.c.h.b16 %v300
    %v1159 = vunpack.c.l.b16 %v301
    %v1160 = vunpack.c.h.b16 %v301
    %v1161 = vunpack.c.l.b16 %v302
    %v1162 = vunpack.c.h.b16 %v302
    %v1163 = vunpack.c.l.b16 %v303
    %v1164 = vunpack.c.h.b16 %v303
    %v1165 = vunpack.c.l.b16 %v304
    %v1166 = vunpack.c.h.b16 %v304
    %v1167 = vpack.c.b16 %v671, %v655
    %v1168 = vpack.c.b16 %v672, %v656
    %v1169 = vpack.c.b16 %v673, %v657
    %v1170 = vpack.c.b16 %v674, %v658
    %v1171 = vpack.c.b16 %v675, %v659
    %v1172 = vpack.c.b16 %v676, %v660
    %v1173 = vpack.c.b16 %v677, %v661
    %v1174 = vpack.c.b16 %v678, %v662
    %v1175 = vpack.c.b16 %v679, %v663
    %v1176 = vpack.c.b16 %v680, %v664
    %v1177 = vpack.c.b16 %v681, %v665
    %v1178 = vpack.c.b16 %v682, %v666
    %v1179 = vpack.c.b16 %v683, %v667
    %v1180 = vpack.c.b16 %v684, %v668
    %v1181 = vpack.c.b16 %v685, %v669
    %v1182 = vpack.c.b16 %v686, %v670
    %v1183 = vpack.c.b16 %v703, %v687
    %v1184 = vpack.c.b16 %v704, %v688
    %v1185 = vpack.c.b16 %v705, %v689
    %v1186 = vpack.c.b16 %v706, %v690
    %v1187 = vpack.c.b16 %v707, %v691
    %v1188 = vpack.c.b16 %v708, %v692
    %v1189 = vpack.c.b16 %v709, %v693
    %v1190 = vpack.c.b16 %v710, %v694
    %v1191 = vpack.c.b16 %v711, %v695
    %v1192 = vpack.c.b16 %v712, %v696
    %v1193 = vpack.c.b16 %v713, %v697
    %v1194 = vpack.c.b16 %v714, %v698
    %v1195 = vpack.c.b16 %v715, %v699
    %v1196 = vpack.c.b16 %v716, %v700
    %v1197 = vpack.c.b16 %v717, %v701
    %v1198 = vpack.c.b16 %v718, %v702
    %v1199 = vpack.c.b16 %v735, %v719
    %v1200 = vpack.c.b16 %v736, %v720
    %v1201 = vpack.c.b16 %v737, %v721
    %v1202 = vpack.c.b16 %v738, %v722
    %v1203 = vpack.c.b16 %v739, %v723
    %v1204 = vpack.c.b16 %v740, %v724
    %v1205 = vpack.c.b16 %v741, %v725
    %v1206 = vpack.c.b16 %v742, %v726
    %v1207 = vpack.c.b16 %v743, %v727
    %v1208 = vpack.c.b16 %v744, %v728
    %v1209 = vpack.c.b16 %v745, %v729
    %v1210 = vpack.c.b16 %v746, %v730
    %v1211 = vpack.c.b16 %v747, %v731
    %v1212 = vpack.c.b16 %v748, %v732
    %v1213 = vpack.c.b16 %v749, %v733
    %v1214 = vpack.c.b16 %v750, %v734
    %v1215 = vpack.c.b16 %v767, %v751
    %v1216 = vpack.c.b16 %v768, %v752
    %v1217 = vpack.c.b16 %v769, %v753
    %v1218 = vpack.c.b16 %v770, %v754
    %v1219 = vpack.c.b16 %v771, %v755
    %v1220 = vpack.c.b16 %v772, %v756
    %v1221 = vpack.c.b16 %v773, %v757
    %v1222 = vpack.c.b16 %v774, %v758
    %v1223 = vpack.c.b16 %v775, %v759
    %v1224 = vpack.c.b16 %v776, %v760
    %v1225 = vpack.c.b16 %v777, %v761
    %v1226 = vpack.c.b16 %v778, %v762
    %v1227 = vpack.c.b16 %v779, %v763
    %v1228 = vpack.c.b16 %v780, %v764
    %v1229 = vpack.c.b16 %v781, %v765
    %v1230 = vpack.c.b16 %v782, %v766
    %v1231 = vpack.c.b16 %v799, %v783
    %v1232 = vpack.c.b16 %v800, %v784
    %v1233 = vpack.c.b16 %v801, %v785
    %v1234 = vpack.c.b16 %v802, %v786
    %v1235 = vpack.c.b16 %v803, %v787
    %v1236 = vpack.c.b16 %v804, %v788
    %v1237 = vpack.c.b16 %v805, %v789
    %v1238 = vpack.c.b16 %v806, %v790
    %v1239 = vpack.c.b16 %v807, %v791
    %v1240 = vpack.c.b16 %v808, %v792
    %v1241 = vpack.c.b16 %v809, %v793
    %v1242 = vpack.c.b16 %v810, %v794
    %v1243 = vpack.c.b16 %v811, %v795
    %v1244 = vpack.c.b16 %v812, %v796
    %v1245 = vpack.c.b16 %v813, %v797
    %v1246 = vpack.c.b16 %v814, %v798
    %v1247 = vpack.c.b16 %v831, %v815
    %v1248 = vpack.c.b16 %v832, %v816
    %v1249 = vpack.c.b16 %v833, %v817
    %v1250 = vpack.c.b16 %v834, %v818
    %v1251 = vpack.c.b16 %v835, %v819
    %v1252 = vpack.c.b16 %v836, %v820
    %v1253 = vpack.c.b16 %v837, %v821
    %v1254 = vpack.c.b16 %v838, %v822
    %v1255 = vpack.c.b16 %v839, %v823
    %v1256 = vpack.c.b16 %v840, %v824
    %v1257 = vpack.c.b16 %v841, %v825
    %v1258 = vpack.c.b16 %v842, %v826
    %v1259 = vpack.c.b16 %v843, %v827
    %v1260 = vpack.c.b16 %v844, %v828
    %v1261 = vpack.c.b16 %v845, %v829
    %v1262 = vpack.c.b16 %v846, %v830
    %v1263 = vpack.c.b16 %v863, %v847
    %v1264 = vpack.c.b16 %v864, %v848
    %v1265 = vpack.c.b16 %v865, %v849
    %v1266 = vpack.c.b16 %v866, %v850
    %v1267 = vpack.c.b16 %v867, %v851
    %v1268 = vpack.c.b16 %v868, %v852
    %v1269 = vpack.c.b16 %v869, %v853
    %v1270 = vpack.c.b16 %v870, %v854
    %v1271 = vpack.c.b16 %v871, %v855
    %v1272 = vpack.c.b16 %v872, %v856
    %v1273 = vpack.c.b16 %v873, %v857
    %v1274 = vpack.c.b16 %v874, %v858
    %v1275 = vpack.c.b16 %v875, %v859
    %v1276 = vpack.c.b16 %v876, %v860
    %v1277 = vpack.c.b16 %v877, %v861
    %v1278 = vpack.c.b16 %v878, %v862
    %v1279 = vpack.c.b16 %v895, %v879
    %v1280 = vpack.c.b16 %v896, %v880
    %v1281 = vpack.c.b16 %v897, %v881
    %v1282 = vpack.c.b16 %v898, %v882
    %v1283 = vpack.c.b16 %v899, %v883
    %v1284 = vpack.c.b16 %v900, %v884
    %v1285 = vpack.c.b16 %v901, %v885
    %v1286 = vpack.c.b16 %v902, %v886
    %v1287 = vpack.c.b16 %v903, %v887
    %v1288 = vpack.c.b16 %v904, %v888
    %v1289 = vpack.c.b16 %v905, %v889
    %v1290 = vpack.c.b16 %v906, %v890
    %v1291 = vpack.c.b16 %v907, %v891
    %v1292 = vpack.c.b16 %v908, %v892
    %v1293 = vpack.c.b16 %v909, %v893
    %v1294 = vpack.c.b16 %v910, %v894
    %v1295 = vpack.c.b16 %v927, %v911
    %v1296 = vpack.c.b16 %v928, %v912
    %v1297 = vpack.c.b16 %v929, %v913
    %v1298 = vpack.c.b16 %v930, %v914
    %v1299 = vpack.c.b16 %v931, %v915
    %v1300 = vpack.c.b16 %v932, %v916
    %v1301 = vpack.c.b16 %v933, %v917
    %v1302 = vpack.c.b16 %v934, %v918
    %v1303 = vpack.c.b16 %v935, %v919
    %v1304 = vpack.c.b16 %v936, %v920
    %v1305 = vpack.c.b16 %v937, %v921
    %v1306 = vpack.c.b16 %v938, %v922
    %v1307 = vpack.c.b16 %v939, %v923
    %v1308 = vpack.c.b16 %v940, %v924
    %v1309 = vpack.c.b16 %v941, %v925
    %v1310 = vpack.c.b16 %v942, %v926
    %v1311 = vpack.c.b16 %v959, %v943
    %v1312 = vpack.c.b16 %v960, %v944
    %v1313 = vpack.c.b16 %v961, %v945
    %v1314 = vpack.c.b16 %v962, %v946
    %v1315 = vpack.c.b16 %v963, %v947
    %v1316 = vpack.c.b16 %v964, %v948
    %v1317 = vpack.c.b16 %v965, %v949
    %v1318 = vpack.c.b16 %v966, %v950
    %v1319 = vpack.c.b16 %v967, %v951
    %v1320 = vpack.c.b16 %v968, %v952
    %v1321 = vpack.c.b16 %v969, %v953
    %v1322 = vpack.c.b16 %v970, %v954
    %v1323 = vpack.c.b16 %v971, %v955
    %v1324 = vpack.c.b16 %v972, %v956
    %v1325 = vpack.c.b16 %v973, %v957
    %v1326 = vpack.c.b16 %v974, %v958
    %v1327 = vpack.c.b16 %v991, %v975
    %v1328 = vpack.c.b16 %v992, %v976
    %v1329 = vpack.c.b16 %v993, %v977
    %v1330 = vpack.c.b16 %v994, %v978
    %v1331 = vpack.c.b16 %v995, %v979
    %v1332 = vpack.c.b16 %v996, %v980
    %v1333 = vpack.c.b16 %v997, %v981
    %v1334 = vpack.c.b16 %v998, %v982
    %v1335 = vpack.c.b16 %v999, %v983
    %v1336 = vpack.c.b16 %v1000, %v984
    %v1337 = vpack.c.b16 %v1001, %v985
    %v1338 = vpack.c.b16 %v1002, %v986
    %v1339 = vpack.c.b16 %v1003, %v987
    %v1340 = vpack.c.b16 %v1004, %v988
    %v1341 = vpack.c.b16 %v1005, %v989
    %v1342 = vpack.c.b16 %v1006, %v990
    %v1343 = vpack.c.b16 %v1023, %v1007
    %v1344 = vpack.c.b16 %v1024, %v1008
    %v1345 = vpack.c.b16 %v1025, %v1009
    %v1346 = vpack.c.b16 %v1026, %v1010
    %v1347 = vpack.c.b16 %v1027, %v1011
    %v1348 = vpack.c.b16 %v1028, %v1012
    %v1349 = vpack.c.b16 %v1029, %v1013
    %v1350 = vpack.c.b16 %v1030, %v1014
    %v1351 = vpack.c.b16 %v1031, %v1015
    %v1352 = vpack.c.b16 %v1032, %v1016
    %v1353 = vpack.c.b16 %v1033, %v1017
    %v1354 = vpack.c.b16 %v1034, %v1018
    %v1355 = vpack.c.b16 %v1035, %v1019
    %v1356 = vpack.c.b16 %v1036, %v1020
    %v1357 = vpack.c.b16 %v1037, %v1021
    %v1358 = vpack.c.b16 %v1038, %v1022
    %v1359 = vpack.c.b16 %v1055, %v1039
    %v1360 = vpack.c.b16 %v1056, %v1040
    %v1361 = vpack.c.b16 %v1057, %v1041
    %v1362 = vpack.c.b16 %v1058, %v1042
    %v1363 = vpack.c.b16 %v1059, %v1043
    %v1364 = vpack.c.b16 %v1060, %v1044
    %v1365 = vpack.c.b16 %v1061, %v1045
    %v1366 = vpack.c.b16 %v1062, %v1046
    %v1367 = vpack.c.b16 %v1063, %v1047
    %v1368 = vpack.c.b16 %v1064, %v1048
    %v1369 = vpack.c.b16 %v1065, %v1049
    %v1370 = vpack.c.b16 %v1066, %v1050
    %v1371 = vpack.c.b16 %v1067, %v1051
    %v1372 = vpack.c.b16 %v1068, %v1052
    %v1373 = vpack.c.b16 %v1069, %v1053
    %v1374 = vpack.c.b16 %v1070, %v1054
    %v1375 = vpack.c.b16 %v1087, %v1071
    %v1376 = vpack.c.b16 %v1088, %v1072
    %v1377 = vpack.c.b16 %v1089, %v1073
    %v1378 = vpack.c.b16 %v1090, %v1074
    %v1379 = vpack.c.b16 %v1091, %v1075
    %v1380 = vpack.c.b16 %v1092, %v1076
    %v1381 = vpack.c.b16 %v1093, %v1077
    %v1382 = vpack.c.b16 %v1094, %v1078
    %v1383 = vpack.c.b16 %v1095, %v1079
    %v1384 = vpack.c.b16 %v1096, %v1080
    %v1385 = vpack.c.b16 %v1097, %v1081
    %v1386 = vpack.c.b16 %v1098, %v1082
    %v1387 = vpack.c.b16 %v1099, %v1083
    %v1388 = vpack.c.b16 %v1100, %v1084
    %v1389 = vpack.c.b16 %v1101, %v1085
    %v1390 = vpack.c.b16 %v1102, %v1086
    %v1391 = vpack.c.b16 %v1119, %v1103
    %v1392 = vpack.c.b16 %v1120, %v1104
    %v1393 = vpack.c.b16 %v1121, %v1105
    %v1394 = vpack.c.b16 %v1122, %v1106
    %v1395 = vpack.c.b16 %v1123, %v1107
    %v1396 = vpack.c.b16 %v1124, %v1108
    %v1397 = vpack.c.b16 %v1125, %v1109
    %v1398 = vpack.c.b16 %v1126, %v1110
    %v1399 = vpack.c.b16 %v1127, %v1111
    %v1400 = vpack.c.b16 %v1128, %v1112
    %v1401 = vpack.c.b16 %v1129, %v1113
    %v1402 = vpack.c.b16 %v1130, %v1114
    %v1403 = vpack.c.b16 %v1131, %v1115
    %v1404 = vpack.c.b16 %v1132, %v1116
    %v1405 = vpack.c.b16 %v1133, %v1117
    %v1406 = vpack.c.b16 %v1134, %v1118
    %v1407 = vpack.c.b16 %v1151, %v1135
    %v1408 = vpack.c.b16 %v1152, %v1136
    %v1409 = vpack.c.b16 %v1153, %v1137
    %v1410 = vpack.c.b16 %v1154, %v1138
    %v1411 = vpack.c.b16 %v1155, %v1139
    %v1412 = vpack.c.b16 %v1156, %v1140
    %v1413 = vpack.c.b16 %v1157, %v1141
    %v1414 = vpack.c.b16 %v1158, %v1142
    %v1415 = vpack.c.b16 %v1159, %v1143
    %v1416 = vpack.c.b16 %v1160, %v1144
    %v1417 = vpack.c.b16 %v1161, %v1145
    %v1418 = vpack.c.b16 %v1162, %v1146
    %v1419 = vpack.c.b16 %v1163, %v1147
    %v1420 = vpack.c.b16 %v1164, %v1148
    %v1421 = vpack.c.b16 %v1165, %v1149
    %v1422 = vpack.c.b16 %v1166, %v1150
    %1679 = vmatprep.subr.bf16.mxu0 %v1168
    %1680 = vmatpush1.bf16.msra.mxu0 %v1167
    %1681 = vmatprep.subr.bf16.mxu0 %v1184
    %1682 = vmatpush1.bf16.msra.mxu0 %v1183
    %1683 = vmatprep.subr.bf16.mxu0 %v1200
    %1684 = vmatpush1.bf16.msra.mxu0 %v1199
    %1685 = vmatprep.subr.bf16.mxu0 %v1216
    %1686 = vmatpush1.bf16.msra.mxu0 %v1215
    %1687 = vmatprep.subr.bf16.mxu0 %v1232
    %1688 = vmatpush1.bf16.msra.mxu0 %v1231
    %1689 = vmatprep.subr.bf16.mxu0 %v1248
    %1690 = vmatpush1.bf16.msra.mxu0 %v1247
    %1691 = vmatprep.subr.bf16.mxu0 %v1264
    %1692 = vmatpush1.bf16.msra.mxu0 %v1263
    %1693 = vmatprep.subr.bf16.mxu0 %v1280
    %1694 = vmatpush1.bf16.msra.mxu0 %v1279
    %1695 = vmatprep.subr.bf16.mxu0 %v1296
    %1696 = vmatpush1.bf16.msra.mxu0 %v1295
    %1697 = vmatprep.subr.bf16.mxu0 %v1312
    %1698 = vmatpush1.bf16.msra.mxu0 %v1311
    %1699 = vmatprep.subr.bf16.mxu0 %v1328
    %1700 = vmatpush1.bf16.msra.mxu0 %v1327
    %1701 = vmatprep.subr.bf16.mxu0 %v1344
    %1702 = vmatpush1.bf16.msra.mxu0 %v1343
    %1703 = vmatprep.subr.bf16.mxu0 %v1360
    %1704 = vmatpush1.bf16.msra.mxu0 %v1359
    %1705 = vmatprep.subr.bf16.mxu0 %v1376
    %1706 = vmatpush1.bf16.msra.mxu0 %v1375
    %1707 = vmatprep.subr.bf16.mxu0 %v1392
    %1708 = vmatpush1.bf16.msra.mxu0 %v1391
    %1709 = vmatprep.subr.bf16.mxu0 %v1408
    %1710 = vmatpush1.bf16.msra.mxu0 %v1407
    %1711 = vmatprep.mubr.bf16.mxu0 %v396
    %1712 = vmatmul.mubr.bf16.gmra.mrb[0].mxu0 %v395
    %v1713 = vpop.f32.mrb[0].mxu0
    %v1714 = vadd.f32 %v312, %v1713
    %v1715 = vpop.f32.mrb[0].mxu0
    %v1716 = vadd.f32 %v316, %v1715
    %v1717 = vpop.f32.mrb[0].mxu0
    %v1718 = vadd.f32 %v312, %v1717
    %v1719 = vpop.f32.mrb[0].mxu0
    %v1720 = vadd.f32 %v316, %v1719
    %1721 = vdwg.mxu0
    %1722 = vmatprep.subr.bf16.mxu0 %v1170
    %1723 = vmatpush1.bf16.msra.mxu0 %v1169
    %1724 = vmatprep.subr.bf16.mxu0 %v1186
    %1725 = vmatpush1.bf16.msra.mxu0 %v1185
    %1726 = vmatprep.subr.bf16.mxu0 %v1202
    %1727 = vmatpush1.bf16.msra.mxu0 %v1201
    %1728 = vmatprep.subr.bf16.mxu0 %v1218
    %1729 = vmatpush1.bf16.msra.mxu0 %v1217
    %1730 = vmatprep.subr.bf16.mxu0 %v1234
    %1731 = vmatpush1.bf16.msra.mxu0 %v1233
    %1732 = vmatprep.subr.bf16.mxu0 %v1250
    %1733 = vmatpush1.bf16.msra.mxu0 %v1249
    %1734 = vmatprep.subr.bf16.mxu0 %v1266
    %1735 = vmatpush1.bf16.msra.mxu0 %v1265
    %1736 = vmatprep.subr.bf16.mxu0 %v1282
    %1737 = vmatpush1.bf16.msra.mxu0 %v1281
    %1738 = vmatprep.subr.bf16.mxu0 %v1298
    %1739 = vmatpush1.bf16.msra.mxu0 %v1297
    %1740 = vmatprep.subr.bf16.mxu0 %v1314
    %1741 = vmatpush1.bf16.msra.mxu0 %v1313
    %1742 = vmatprep.subr.bf16.mxu0 %v1330
    %1743 = vmatpush1.bf16.msra.mxu0 %v1329
    %1744 = vmatprep.subr.bf16.mxu0 %v1346
    %1745 = vmatpush1.bf16.msra.mxu0 %v1345
    %1746 = vmatprep.subr.bf16.mxu0 %v1362
    %1747 = vmatpush1.bf16.msra.mxu0 %v1361
    %1748 = vmatprep.subr.bf16.mxu0 %v1378
    %1749 = vmatpush1.bf16.msra.mxu0 %v1377
    %1750 = vmatprep.subr.bf16.mxu0 %v1394
    %1751 = vmatpush1.bf16.msra.mxu0 %v1393
    %1752 = vmatprep.subr.bf16.mxu0 %v1410
    %1753 = vmatpush1.bf16.msra.mxu0 %v1409
    %1754 = vmatprep.mubr.bf16.mxu0 %v396
    %1755 = vmatmul.mubr.bf16.gmra.mrb[0].mxu0 %v395
    %v1756 = vpop.f32.mrb[0].mxu0
    %v1757 = vadd.f32 %v320, %v1756
    %v1758 = vpop.f32.mrb[0].mxu0
    %v1759 = vadd.f32 %v324, %v1758
    %v1760 = vpop.f32.mrb[0].mxu0
    %v1761 = vadd.f32 %v320, %v1760
    %v1762 = vpop.f32.mrb[0].mxu0
    %v1763 = vadd.f32 %v324, %v1762
    %1764 = vdwg.mxu0
    %1765 = vmatprep.subr.bf16.mxu0 %v1172
    %1766 = vmatpush1.bf16.msra.mxu0 %v1171
    %1767 = vmatprep.subr.bf16.mxu0 %v1188
    %1768 = vmatpush1.bf16.msra.mxu0 %v1187
    %1769 = vmatprep.subr.bf16.mxu0 %v1204
    %1770 = vmatpush1.bf16.msra.mxu0 %v1203
    %1771 = vmatprep.subr.bf16.mxu0 %v1220
    %1772 = vmatpush1.bf16.msra.mxu0 %v1219
    %1773 = vmatprep.subr.bf16.mxu0 %v1236
    %1774 = vmatpush1.bf16.msra.mxu0 %v1235
    %1775 = vmatprep.subr.bf16.mxu0 %v1252
    %1776 = vmatpush1.bf16.msra.mxu0 %v1251
    %1777 = vmatprep.subr.bf16.mxu0 %v1268
    %1778 = vmatpush1.bf16.msra.mxu0 %v1267
    %1779 = vmatprep.subr.bf16.mxu0 %v1284
    %1780 = vmatpush1.bf16.msra.mxu0 %v1283
    %1781 = vmatprep.subr.bf16.mxu0 %v1300
    %1782 = vmatpush1.bf16.msra.mxu0 %v1299
    %1783 = vmatprep.subr.bf16.mxu0 %v1316
    %1784 = vmatpush1.bf16.msra.mxu0 %v1315
    %1785 = vmatprep.subr.bf16.mxu0 %v1332
    %1786 = vmatpush1.bf16.msra.mxu0 %v1331
    %1787 = vmatprep.subr.bf16.mxu0 %v1348
    %1788 = vmatpush1.bf16.msra.mxu0 %v1347
    %1789 = vmatprep.subr.bf16.mxu0 %v1364
    %1790 = vmatpush1.bf16.msra.mxu0 %v1363
    %1791 = vmatprep.subr.bf16.mxu0 %v1380
    %1792 = vmatpush1.bf16.msra.mxu0 %v1379
    %1793 = vmatprep.subr.bf16.mxu0 %v1396
    %1794 = vmatpush1.bf16.msra.mxu0 %v1395
    %1795 = vmatprep.subr.bf16.mxu0 %v1412
    %1796 = vmatpush1.bf16.msra.mxu0 %v1411
    %1797 = vmatprep.mubr.bf16.mxu0 %v396
    %1798 = vmatmul.mubr.bf16.gmra.mrb[0].mxu0 %v395
    %v1799 = vpop.f32.mrb[0].mxu0
    %v1800 = vadd.f32 %v328, %v1799
    %v1801 = vpop.f32.mrb[0].mxu0
    %v1802 = vadd.f32 %v332, %v1801
    %v1803 = vpop.f32.mrb[0].mxu0
    %v1804 = vadd.f32 %v328, %v1803
    %v1805 = vpop.f32.mrb[0].mxu0
    %v1806 = vadd.f32 %v332, %v1805
    %1807 = vdwg.mxu0
    %1808 = vmatprep.subr.bf16.mxu0 %v1174
    %1809 = vmatpush1.bf16.msra.mxu0 %v1173
    %1810 = vmatprep.subr.bf16.mxu0 %v1190
    %1811 = vmatpush1.bf16.msra.mxu0 %v1189
    %1812 = vmatprep.subr.bf16.mxu0 %v1206
    %1813 = vmatpush1.bf16.msra.mxu0 %v1205
    %1814 = vmatprep.subr.bf16.mxu0 %v1222
    %1815 = vmatpush1.bf16.msra.mxu0 %v1221
    %1816 = vmatprep.subr.bf16.mxu0 %v1238
    %1817 = vmatpush1.bf16.msra.mxu0 %v1237
    %1818 = vmatprep.subr.bf16.mxu0 %v1254
    %1819 = vmatpush1.bf16.msra.mxu0 %v1253
    %1820 = vmatprep.subr.bf16.mxu0 %v1270
    %1821 = vmatpush1.bf16.msra.mxu0 %v1269
    %1822 = vmatprep.subr.bf16.mxu0 %v1286
    %1823 = vmatpush1.bf16.msra.mxu0 %v1285
    %1824 = vmatprep.subr.bf16.mxu0 %v1302
    %1825 = vmatpush1.bf16.msra.mxu0 %v1301
    %1826 = vmatprep.subr.bf16.mxu0 %v1318
    %1827 = vmatpush1.bf16.msra.mxu0 %v1317
    %1828 = vmatprep.subr.bf16.mxu0 %v1334
    %1829 = vmatpush1.bf16.msra.mxu0 %v1333
    %1830 = vmatprep.subr.bf16.mxu0 %v1350
    %1831 = vmatpush1.bf16.msra.mxu0 %v1349
    %1832 = vmatprep.subr.bf16.mxu0 %v1366
    %1833 = vmatpush1.bf16.msra.mxu0 %v1365
    %1834 = vmatprep.subr.bf16.mxu0 %v1382
    %1835 = vmatpush1.bf16.msra.mxu0 %v1381
    %1836 = vmatprep.subr.bf16.mxu0 %v1398
    %1837 = vmatpush1.bf16.msra.mxu0 %v1397
    %1838 = vmatprep.subr.bf16.mxu0 %v1414
    %1839 = vmatpush1.bf16.msra.mxu0 %v1413
    %1840 = vmatprep.mubr.bf16.mxu0 %v396
    %1841 = vmatmul.mubr.bf16.gmra.mrb[0].mxu0 %v395
    %v1842 = vpop.f32.mrb[0].mxu0
    %v1843 = vadd.f32 %v336, %v1842
    %v1844 = vpop.f32.mrb[0].mxu0
    %v1845 = vadd.f32 %v340, %v1844
    %v1846 = vpop.f32.mrb[0].mxu0
    %v1847 = vadd.f32 %v336, %v1846
    %v1848 = vpop.f32.mrb[0].mxu0
    %v1849 = vadd.f32 %v340, %v1848
    %1850 = vdwg.mxu0
    %1851 = vmatprep.subr.bf16.mxu0 %v1176
    %1852 = vmatpush1.bf16.msra.mxu0 %v1175
    %1853 = vmatprep.subr.bf16.mxu0 %v1192
    %1854 = vmatpush1.bf16.msra.mxu0 %v1191
    %1855 = vmatprep.subr.bf16.mxu0 %v1208
    %1856 = vmatpush1.bf16.msra.mxu0 %v1207
    %1857 = vmatprep.subr.bf16.mxu0 %v1224
    %1858 = vmatpush1.bf16.msra.mxu0 %v1223
    %1859 = vmatprep.subr.bf16.mxu0 %v1240
    %1860 = vmatpush1.bf16.msra.mxu0 %v1239
    %1861 = vmatprep.subr.bf16.mxu0 %v1256
    %1862 = vmatpush1.bf16.msra.mxu0 %v1255
    %1863 = vmatprep.subr.bf16.mxu0 %v1272
    %1864 = vmatpush1.bf16.msra.mxu0 %v1271
    %1865 = vmatprep.subr.bf16.mxu0 %v1288
    %1866 = vmatpush1.bf16.msra.mxu0 %v1287
    %1867 = vmatprep.subr.bf16.mxu0 %v1304
    %1868 = vmatpush1.bf16.msra.mxu0 %v1303
    %1869 = vmatprep.subr.bf16.mxu0 %v1320
    %1870 = vmatpush1.bf16.msra.mxu0 %v1319
    %1871 = vmatprep.subr.bf16.mxu0 %v1336
    %1872 = vmatpush1.bf16.msra.mxu0 %v1335
    %1873 = vmatprep.subr.bf16.mxu0 %v1352
    %1874 = vmatpush1.bf16.msra.mxu0 %v1351
    %1875 = vmatprep.subr.bf16.mxu0 %v1368
    %1876 = vmatpush1.bf16.msra.mxu0 %v1367
    %1877 = vmatprep.subr.bf16.mxu0 %v1384
    %1878 = vmatpush1.bf16.msra.mxu0 %v1383
    %1879 = vmatprep.subr.bf16.mxu0 %v1400
    %1880 = vmatpush1.bf16.msra.mxu0 %v1399
    %1881 = vmatprep.subr.bf16.mxu0 %v1416
    %1882 = vmatpush1.bf16.msra.mxu0 %v1415
    %1883 = vmatprep.mubr.bf16.mxu0 %v396
    %1884 = vmatmul.mubr.bf16.gmra.mrb[0].mxu0 %v395
    %v1885 = vpop.f32.mrb[0].mxu0
    %v1886 = vadd.f32 %v344, %v1885
    %v1887 = vpop.f32.mrb[0].mxu0
    %v1888 = vadd.f32 %v348, %v1887
    %v1889 = vpop.f32.mrb[0].mxu0
    %v1890 = vadd.f32 %v344, %v1889
    %v1891 = vpop.f32.mrb[0].mxu0
    %v1892 = vadd.f32 %v348, %v1891
    %1893 = vdwg.mxu0
    %1894 = vmatprep.subr.bf16.mxu0 %v1178
    %1895 = vmatpush1.bf16.msra.mxu0 %v1177
    %1896 = vmatprep.subr.bf16.mxu0 %v1194
    %1897 = vmatpush1.bf16.msra.mxu0 %v1193
    %1898 = vmatprep.subr.bf16.mxu0 %v1210
    %1899 = vmatpush1.bf16.msra.mxu0 %v1209
    %1900 = vmatprep.subr.bf16.mxu0 %v1226
    %1901 = vmatpush1.bf16.msra.mxu0 %v1225
    %1902 = vmatprep.subr.bf16.mxu0 %v1242
    %1903 = vmatpush1.bf16.msra.mxu0 %v1241
    %1904 = vmatprep.subr.bf16.mxu0 %v1258
    %1905 = vmatpush1.bf16.msra.mxu0 %v1257
    %1906 = vmatprep.subr.bf16.mxu0 %v1274
    %1907 = vmatpush1.bf16.msra.mxu0 %v1273
    %1908 = vmatprep.subr.bf16.mxu0 %v1290
    %1909 = vmatpush1.bf16.msra.mxu0 %v1289
    %1910 = vmatprep.subr.bf16.mxu0 %v1306
    %1911 = vmatpush1.bf16.msra.mxu0 %v1305
    %1912 = vmatprep.subr.bf16.mxu0 %v1322
    %1913 = vmatpush1.bf16.msra.mxu0 %v1321
    %1914 = vmatprep.subr.bf16.mxu0 %v1338
    %1915 = vmatpush1.bf16.msra.mxu0 %v1337
    %1916 = vmatprep.subr.bf16.mxu0 %v1354
    %1917 = vmatpush1.bf16.msra.mxu0 %v1353
    %1918 = vmatprep.subr.bf16.mxu0 %v1370
    %1919 = vmatpush1.bf16.msra.mxu0 %v1369
    %1920 = vmatprep.subr.bf16.mxu0 %v1386
    %1921 = vmatpush1.bf16.msra.mxu0 %v1385
    %1922 = vmatprep.subr.bf16.mxu0 %v1402
    %1923 = vmatpush1.bf16.msra.mxu0 %v1401
    %1924 = vmatprep.subr.bf16.mxu0 %v1418
    %1925 = vmatpush1.bf16.msra.mxu0 %v1417
    %1926 = vmatprep.mubr.bf16.mxu0 %v396
    %1927 = vmatmul.mubr.bf16.gmra.mrb[0].mxu0 %v395
    %v1928 = vpop.f32.mrb[0].mxu0
    %v1929 = vadd.f32 %v352, %v1928
    %v1930 = vpop.f32.mrb[0].mxu0
    %v1931 = vadd.f32 %v356, %v1930
    %v1932 = vpop.f32.mrb[0].mxu0
    %v1933 = vadd.f32 %v352, %v1932
    %v1934 = vpop.f32.mrb[0].mxu0
    %v1935 = vadd.f32 %v356, %v1934
    %1936 = vdwg.mxu0
    %1937 = vmatprep.subr.bf16.mxu0 %v1180
    %1938 = vmatpush1.bf16.msra.mxu0 %v1179
    %1939 = vmatprep.subr.bf16.mxu0 %v1196
    %1940 = vmatpush1.bf16.msra.mxu0 %v1195
    %1941 = vmatprep.subr.bf16.mxu0 %v1212
    %1942 = vmatpush1.bf16.msra.mxu0 %v1211
    %1943 = vmatprep.subr.bf16.mxu0 %v1228
    %1944 = vmatpush1.bf16.msra.mxu0 %v1227
    %1945 = vmatprep.subr.bf16.mxu0 %v1244
    %1946 = vmatpush1.bf16.msra.mxu0 %v1243
    %1947 = vmatprep.subr.bf16.mxu0 %v1260
    %1948 = vmatpush1.bf16.msra.mxu0 %v1259
    %1949 = vmatprep.subr.bf16.mxu0 %v1276
    %1950 = vmatpush1.bf16.msra.mxu0 %v1275
    %1951 = vmatprep.subr.bf16.mxu0 %v1292
    %1952 = vmatpush1.bf16.msra.mxu0 %v1291
    %1953 = vmatprep.subr.bf16.mxu0 %v1308
    %1954 = vmatpush1.bf16.msra.mxu0 %v1307
    %1955 = vmatprep.subr.bf16.mxu0 %v1324
    %1956 = vmatpush1.bf16.msra.mxu0 %v1323
    %1957 = vmatprep.subr.bf16.mxu0 %v1340
    %1958 = vmatpush1.bf16.msra.mxu0 %v1339
    %1959 = vmatprep.subr.bf16.mxu0 %v1356
    %1960 = vmatpush1.bf16.msra.mxu0 %v1355
    %1961 = vmatprep.subr.bf16.mxu0 %v1372
    %1962 = vmatpush1.bf16.msra.mxu0 %v1371
    %1963 = vmatprep.subr.bf16.mxu0 %v1388
    %1964 = vmatpush1.bf16.msra.mxu0 %v1387
    %1965 = vmatprep.subr.bf16.mxu0 %v1404
    %1966 = vmatpush1.bf16.msra.mxu0 %v1403
    %1967 = vmatprep.subr.bf16.mxu0 %v1420
    %1968 = vmatpush1.bf16.msra.mxu0 %v1419
    %1969 = vmatprep.mubr.bf16.mxu0 %v396
    %1970 = vmatmul.mubr.bf16.gmra.mrb[0].mxu0 %v395
    %v1971 = vpop.f32.mrb[0].mxu0
    %v1972 = vadd.f32 %v360, %v1971
    %v1973 = vpop.f32.mrb[0].mxu0
    %v1974 = vadd.f32 %v364, %v1973
    %v1975 = vpop.f32.mrb[0].mxu0
    %v1976 = vadd.f32 %v360, %v1975
    %v1977 = vpop.f32.mrb[0].mxu0
    %v1978 = vadd.f32 %v364, %v1977
    %1979 = vdwg.mxu0
    %1980 = vmatprep.subr.bf16.mxu0 %v1182
    %1981 = vmatpush1.bf16.msra.mxu0 %v1181
    %1982 = vmatprep.subr.bf16.mxu0 %v1198
    %1983 = vmatpush1.bf16.msra.mxu0 %v1197
    %1984 = vmatprep.subr.bf16.mxu0 %v1214
    %1985 = vmatpush1.bf16.msra.mxu0 %v1213
    %1986 = vmatprep.subr.bf16.mxu0 %v1230
    %1987 = vmatpush1.bf16.msra.mxu0 %v1229
    %1988 = vmatprep.subr.bf16.mxu0 %v1246
    %1989 = vmatpush1.bf16.msra.mxu0 %v1245
    %1990 = vmatprep.subr.bf16.mxu0 %v1262
    %1991 = vmatpush1.bf16.msra.mxu0 %v1261
    %1992 = vmatprep.subr.bf16.mxu0 %v1278
    %1993 = vmatpush1.bf16.msra.mxu0 %v1277
    %1994 = vmatprep.subr.bf16.mxu0 %v1294
    %1995 = vmatpush1.bf16.msra.mxu0 %v1293
    %1996 = vmatprep.subr.bf16.mxu0 %v1310
    %1997 = vmatpush1.bf16.msra.mxu0 %v1309
    %1998 = vmatprep.subr.bf16.mxu0 %v1326
    %1999 = vmatpush1.bf16.msra.mxu0 %v1325
    %2000 = vmatprep.subr.bf16.mxu0 %v1342
    %2001 = vmatpush1.bf16.msra.mxu0 %v1341
    %2002 = vmatprep.subr.bf16.mxu0 %v1358
    %2003 = vmatpush1.bf16.msra.mxu0 %v1357
    %2004 = vmatprep.subr.bf16.mxu0 %v1374
    %2005 = vmatpush1.bf16.msra.mxu0 %v1373
    %2006 = vmatprep.subr.bf16.mxu0 %v1390
    %2007 = vmatpush1.bf16.msra.mxu0 %v1389
    %2008 = vmatprep.subr.bf16.mxu0 %v1406
    %2009 = vmatpush1.bf16.msra.mxu0 %v1405
    %2010 = vmatprep.subr.bf16.mxu0 %v1422
    %2011 = vmatpush1.bf16.msra.mxu0 %v1421
    %2012 = vmatprep.mubr.bf16.mxu0 %v396
    %2013 = vmatmul.mubr.bf16.gmra.mrb[0].mxu0 %v395
    %v2014 = vpop.f32.mrb[0].mxu0
    %v2015 = vadd.f32 %v368, %v2014
    %v2016 = vpop.f32.mrb[0].mxu0
    %v2017 = vadd.f32 %v372, %v2016
    %v2018 = vpop.f32.mrb[0].mxu0
    %v2019 = vadd.f32 %v368, %v2018
    %v2020 = vpop.f32.mrb[0].mxu0
    %v2021 = vadd.f32 %v372, %v2020
    %2022 = vdwg.mxu0
    %v2023 = vmax.f32 %v1714, 0.0
    %v2024 = vmax.f32 %v1716, 0.0
    %v2025 = vmax.f32 %v1757, 0.0
    %v2026 = vmax.f32 %v1759, 0.0
    %v2027 = vmax.f32 %v1800, 0.0
    %v2028 = vmax.f32 %v1802, 0.0
    %v2029 = vmax.f32 %v1843, 0.0
    %v2030 = vmax.f32 %v1845, 0.0
    %v2031 = vmax.f32 %v1886, 0.0
    %v2032 = vmax.f32 %v1888, 0.0
    %v2033 = vmax.f32 %v1929, 0.0
    %v2034 = vmax.f32 %v1931, 0.0
    %v2035 = vmax.f32 %v1972, 0.0
    %v2036 = vmax.f32 %v1974, 0.0
    %v2037 = vmax.f32 %v2015, 0.0
    %v2038 = vmax.f32 %v2017, 0.0
    %v2039 = vmax.f32 %v1718, 0.0
    %v2040 = vmax.f32 %v1720, 0.0
    %v2041 = vmax.f32 %v1761, 0.0
    %v2042 = vmax.f32 %v1763, 0.0
    %v2043 = vmax.f32 %v1804, 0.0
    %v2044 = vmax.f32 %v1806, 0.0
    %v2045 = vmax.f32 %v1847, 0.0
    %v2046 = vmax.f32 %v1849, 0.0
    %v2047 = vmax.f32 %v1890, 0.0
    %v2048 = vmax.f32 %v1892, 0.0
    %v2049 = vmax.f32 %v1933, 0.0
    %v2050 = vmax.f32 %v1935, 0.0
    %v2051 = vmax.f32 %v1976, 0.0
    %v2052 = vmax.f32 %v1978, 0.0
    %v2053 = vmax.f32 %v2019, 0.0
    %v2054 = vmax.f32 %v2021, 0.0
    %v2055 = vpack.c.bf16 %v2039, %v2023
    %v2056 = vpack.c.bf16 %v2040, %v2024
    %v2057 = vpack.c.bf16 %v2041, %v2025
    %v2058 = vpack.c.bf16 %v2042, %v2026
    %v2059 = vpack.c.bf16 %v2043, %v2027
    %v2060 = vpack.c.bf16 %v2044, %v2028
    %v2061 = vpack.c.bf16 %v2045, %v2029
    %v2062 = vpack.c.bf16 %v2046, %v2030
    %v2063 = vpack.c.bf16 %v2047, %v2031
    %v2064 = vpack.c.bf16 %v2048, %v2032
    %v2065 = vpack.c.bf16 %v2049, %v2033
    %v2066 = vpack.c.bf16 %v2050, %v2034
    %v2067 = vpack.c.bf16 %v2051, %v2035
    %v2068 = vpack.c.bf16 %v2052, %v2036
    %v2069 = vpack.c.bf16 %v2053, %v2037
    %v2070 = vpack.c.bf16 %v2054, %v2038
    %v2071 = vld [vmem:[%s4] sm:$0xf]
    %v2072 = vld [vmem:[%s4 + $0x4] sm:$0xf]
    %v2073 = vld [vmem:[%s4 + $0x8] sm:$0xf]
    %v2074 = vld [vmem:[%s4 + $0xc] sm:$0xf]
    %v2075 = vld [vmem:[%s4 + $0x10] sm:$0xf]
    %v2076 = vld [vmem:[%s4 + $0x14] sm:$0xf]
    %v2077 = vld [vmem:[%s4 + $0x18] sm:$0xf]
    %v2078 = vld [vmem:[%s4 + $0x1c] sm:$0xf]
    %v2079 = vld [vmem:[%s4 + $0x20] sm:$0xf]
    %v2080 = vld [vmem:[%s4 + $0x24] sm:$0xf]
    %v2081 = vld [vmem:[%s4 + $0x28] sm:$0xf]
    %v2082 = vld [vmem:[%s4 + $0x2c] sm:$0xf]
    %v2083 = vld [vmem:[%s4 + $0x30] sm:$0xf]
    %v2084 = vld [vmem:[%s4 + $0x34] sm:$0xf]
    %v2085 = vld [vmem:[%s4 + $0x38] sm:$0xf]
    %v2086 = vld [vmem:[%s4 + $0x3c] sm:$0xf]
    %v2087 = vld [vmem:[%s4 + $0x40] sm:$0xf]
    %v2088 = vld [vmem:[%s4 + $0x44] sm:$0xf]
    %v2089 = vld [vmem:[%s4 + $0x48] sm:$0xf]
    %v2090 = vld [vmem:[%s4 + $0x4c] sm:$0xf]
    %v2091 = vld [vmem:[%s4 + $0x50] sm:$0xf]
    %v2092 = vld [vmem:[%s4 + $0x54] sm:$0xf]
    %v2093 = vld [vmem:[%s4 + $0x58] sm:$0xf]
    %v2094 = vld [vmem:[%s4 + $0x5c] sm:$0xf]
    %v2095 = vld [vmem:[%s4 + $0x60] sm:$0xf]
    %v2096 = vld [vmem:[%s4 + $0x64] sm:$0xf]
    %v2097 = vld [vmem:[%s4 + $0x68] sm:$0xf]
    %v2098 = vld [vmem:[%s4 + $0x6c] sm:$0xf]
    %v2099 = vld [vmem:[%s4 + $0x70] sm:$0xf]
    %v2100 = vld [vmem:[%s4 + $0x74] sm:$0xf]
    %v2101 = vld [vmem:[%s4 + $0x78] sm:$0xf]
    %v2102 = vld [vmem:[%s4 + $0x7c] sm:$0xf]
    %v2103 = vld [vmem:[%s4 + $0x80] sm:$0xf]
    %v2104 = vld [vmem:[%s4 + $0x84] sm:$0xf]
    %v2105 = vld [vmem:[%s4 + $0x88] sm:$0xf]
    %v2106 = vld [vmem:[%s4 + $0x8c] sm:$0xf]
    %v2107 = vld [vmem:[%s4 + $0x90] sm:$0xf]
    %v2108 = vld [vmem:[%s4 + $0x94] sm:$0xf]
    %v2109 = vld [vmem:[%s4 + $0x98] sm:$0xf]
    %v2110 = vld [vmem:[%s4 + $0x9c] sm:$0xf]
    %v2111 = vld [vmem:[%s4 + $0xa0] sm:$0xf]
    %v2112 = vld [vmem:[%s4 + $0xa4] sm:$0xf]
    %v2113 = vld [vmem:[%s4 + $0xa8] sm:$0xf]
    %v2114 = vld [vmem:[%s4 + $0xac] sm:$0xf]
    %v2115 = vld [vmem:[%s4 + $0xb0] sm:$0xf]
    %v2116 = vld [vmem:[%s4 + $0xb4] sm:$0xf]
    %v2117 = vld [vmem:[%s4 + $0xb8] sm:$0xf]
    %v2118 = vld [vmem:[%s4 + $0xbc] sm:$0xf]
    %v2119 = vld [vmem:[%s4 + $0xc0] sm:$0xf]
    %v2120 = vld [vmem:[%s4 + $0xc4] sm:$0xf]
    %v2121 = vld [vmem:[%s4 + $0xc8] sm:$0xf]
    %v2122 = vld [vmem:[%s4 + $0xcc] sm:$0xf]
    %v2123 = vld [vmem:[%s4 + $0xd0] sm:$0xf]
    %v2124 = vld [vmem:[%s4 + $0xd4] sm:$0xf]
    %v2125 = vld [vmem:[%s4 + $0xd8] sm:$0xf]
    %v2126 = vld [vmem:[%s4 + $0xdc] sm:$0xf]
    %v2127 = vld [vmem:[%s4 + $0xe0] sm:$0xf]
    %v2128 = vld [vmem:[%s4 + $0xe4] sm:$0xf]
    %v2129 = vld [vmem:[%s4 + $0xe8] sm:$0xf]
    %v2130 = vld [vmem:[%s4 + $0xec] sm:$0xf]
    %v2131 = vld [vmem:[%s4 + $0xf0] sm:$0xf]
    %v2132 = vld [vmem:[%s4 + $0xf4] sm:$0xf]
    %v2133 = vld [vmem:[%s4 + $0xf8] sm:$0xf]
    %v2134 = vld [vmem:[%s4 + $0xfc] sm:$0xf]
    %v2135 = vld [vmem:[%s4 + $0x100] sm:$0xf]
    %v2136 = vld [vmem:[%s4 + $0x104] sm:$0xf]
    %v2137 = vld [vmem:[%s4 + $0x108] sm:$0xf]
    %v2138 = vld [vmem:[%s4 + $0x10c] sm:$0xf]
    %v2139 = vld [vmem:[%s4 + $0x110] sm:$0xf]
    %v2140 = vld [vmem:[%s4 + $0x114] sm:$0xf]
    %v2141 = vld [vmem:[%s4 + $0x118] sm:$0xf]
    %v2142 = vld [vmem:[%s4 + $0x11c] sm:$0xf]
    %v2143 = vld [vmem:[%s4 + $0x120] sm:$0xf]
    %v2144 = vld [vmem:[%s4 + $0x124] sm:$0xf]
    %v2145 = vld [vmem:[%s4 + $0x128] sm:$0xf]
    %v2146 = vld [vmem:[%s4 + $0x12c] sm:$0xf]
    %v2147 = vld [vmem:[%s4 + $0x130] sm:$0xf]
    %v2148 = vld [vmem:[%s4 + $0x134] sm:$0xf]
    %v2149 = vld [vmem:[%s4 + $0x138] sm:$0xf]
    %v2150 = vld [vmem:[%s4 + $0x13c] sm:$0xf]
    %v2151 = vld [vmem:[%s4 + $0x140] sm:$0xf]
    %v2152 = vld [vmem:[%s4 + $0x144] sm:$0xf]
    %v2153 = vld [vmem:[%s4 + $0x148] sm:$0xf]
    %v2154 = vld [vmem:[%s4 + $0x14c] sm:$0xf]
    %v2155 = vld [vmem:[%s4 + $0x150] sm:$0xf]
    %v2156 = vld [vmem:[%s4 + $0x154] sm:$0xf]
    %v2157 = vld [vmem:[%s4 + $0x158] sm:$0xf]
    %v2158 = vld [vmem:[%s4 + $0x15c] sm:$0xf]
    %v2159 = vld [vmem:[%s4 + $0x160] sm:$0xf]
    %v2160 = vld [vmem:[%s4 + $0x164] sm:$0xf]
    %v2161 = vld [vmem:[%s4 + $0x168] sm:$0xf]
    %v2162 = vld [vmem:[%s4 + $0x16c] sm:$0xf]
    %v2163 = vld [vmem:[%s4 + $0x170] sm:$0xf]
    %v2164 = vld [vmem:[%s4 + $0x174] sm:$0xf]
    %v2165 = vld [vmem:[%s4 + $0x178] sm:$0xf]
    %v2166 = vld [vmem:[%s4 + $0x17c] sm:$0xf]
    %v2167 = vld [vmem:[%s4 + $0x180] sm:$0xf]
    %v2168 = vld [vmem:[%s4 + $0x184] sm:$0xf]
    %v2169 = vld [vmem:[%s4 + $0x188] sm:$0xf]
    %v2170 = vld [vmem:[%s4 + $0x18c] sm:$0xf]
    %v2171 = vld [vmem:[%s4 + $0x190] sm:$0xf]
    %v2172 = vld [vmem:[%s4 + $0x194] sm:$0xf]
    %v2173 = vld [vmem:[%s4 + $0x198] sm:$0xf]
    %v2174 = vld [vmem:[%s4 + $0x19c] sm:$0xf]
    %v2175 = vld [vmem:[%s4 + $0x1a0] sm:$0xf]
    %v2176 = vld [vmem:[%s4 + $0x1a4] sm:$0xf]
    %v2177 = vld [vmem:[%s4 + $0x1a8] sm:$0xf]
    %v2178 = vld [vmem:[%s4 + $0x1ac] sm:$0xf]
    %v2179 = vld [vmem:[%s4 + $0x1b0] sm:$0xf]
    %v2180 = vld [vmem:[%s4 + $0x1b4] sm:$0xf]
    %v2181 = vld [vmem:[%s4 + $0x1b8] sm:$0xf]
    %v2182 = vld [vmem:[%s4 + $0x1bc] sm:$0xf]
    %v2183 = vld [vmem:[%s4 + $0x1c0] sm:$0xf]
    %v2184 = vld [vmem:[%s4 + $0x1c4] sm:$0xf]
    %v2185 = vld [vmem:[%s4 + $0x1c8] sm:$0xf]
    %v2186 = vld [vmem:[%s4 + $0x1cc] sm:$0xf]
    %v2187 = vld [vmem:[%s4 + $0x1d0] sm:$0xf]
    %v2188 = vld [vmem:[%s4 + $0x1d4] sm:$0xf]
    %v2189 = vld [vmem:[%s4 + $0x1d8] sm:$0xf]
    %v2190 = vld [vmem:[%s4 + $0x1dc] sm:$0xf]
    %v2191 = vld [vmem:[%s4 + $0x1e0] sm:$0xf]
    %v2192 = vld [vmem:[%s4 + $0x1e4] sm:$0xf]
    %v2193 = vld [vmem:[%s4 + $0x1e8] sm:$0xf]
    %v2194 = vld [vmem:[%s4 + $0x1ec] sm:$0xf]
    %v2195 = vld [vmem:[%s4 + $0x1f0] sm:$0xf]
    %v2196 = vld [vmem:[%s4 + $0x1f4] sm:$0xf]
    %v2197 = vld [vmem:[%s4 + $0x1f8] sm:$0xf]
    %v2198 = vld [vmem:[%s4 + $0x1fc] sm:$0xf]
    %v2199 = vld [vmem:[%s4 + $0x200] sm:$0xf]
    %v2200 = vld [vmem:[%s4 + $0x204] sm:$0xf]
    %v2201 = vld [vmem:[%s4 + $0x208] sm:$0xf]
    %v2202 = vld [vmem:[%s4 + $0x20c] sm:$0xf]
    %v2203 = vld [vmem:[%s4 + $0x210] sm:$0xf]
    %v2204 = vld [vmem:[%s4 + $0x214] sm:$0xf]
    %v2205 = vld [vmem:[%s4 + $0x218] sm:$0xf]
    %v2206 = vld [vmem:[%s4 + $0x21c] sm:$0xf]
    %v2207 = vld [vmem:[%s4 + $0x220] sm:$0xf]
    %v2208 = vld [vmem:[%s4 + $0x224] sm:$0xf]
    %v2209 = vld [vmem:[%s4 + $0x228] sm:$0xf]
    %v2210 = vld [vmem:[%s4 + $0x22c] sm:$0xf]
    %v2211 = vld [vmem:[%s4 + $0x230] sm:$0xf]
    %v2212 = vld [vmem:[%s4 + $0x234] sm:$0xf]
    %v2213 = vld [vmem:[%s4 + $0x238] sm:$0xf]
    %v2214 = vld [vmem:[%s4 + $0x23c] sm:$0xf]
    %v2215 = vld [vmem:[%s4 + $0x240] sm:$0xf]
    %v2216 = vld [vmem:[%s4 + $0x244] sm:$0xf]
    %v2217 = vld [vmem:[%s4 + $0x248] sm:$0xf]
    %v2218 = vld [vmem:[%s4 + $0x24c] sm:$0xf]
    %v2219 = vld [vmem:[%s4 + $0x250] sm:$0xf]
    %v2220 = vld [vmem:[%s4 + $0x254] sm:$0xf]
    %v2221 = vld [vmem:[%s4 + $0x258] sm:$0xf]
    %v2222 = vld [vmem:[%s4 + $0x25c] sm:$0xf]
    %v2223 = vld [vmem:[%s4 + $0x260] sm:$0xf]
    %v2224 = vld [vmem:[%s4 + $0x264] sm:$0xf]
    %v2225 = vld [vmem:[%s4 + $0x268] sm:$0xf]
    %v2226 = vld [vmem:[%s4 + $0x26c] sm:$0xf]
    %v2227 = vld [vmem:[%s4 + $0x270] sm:$0xf]
    %v2228 = vld [vmem:[%s4 + $0x274] sm:$0xf]
    %v2229 = vld [vmem:[%s4 + $0x278] sm:$0xf]
    %v2230 = vld [vmem:[%s4 + $0x27c] sm:$0xf]
    %v2231 = vld [vmem:[%s4 + $0x280] sm:$0xf]
    %v2232 = vld [vmem:[%s4 + $0x284] sm:$0xf]
    %v2233 = vld [vmem:[%s4 + $0x288] sm:$0xf]
    %v2234 = vld [vmem:[%s4 + $0x28c] sm:$0xf]
    %v2235 = vld [vmem:[%s4 + $0x290] sm:$0xf]
    %v2236 = vld [vmem:[%s4 + $0x294] sm:$0xf]
    %v2237 = vld [vmem:[%s4 + $0x298] sm:$0xf]
    %v2238 = vld [vmem:[%s4 + $0x29c] sm:$0xf]
    %v2239 = vld [vmem:[%s4 + $0x2a0] sm:$0xf]
    %v2240 = vld [vmem:[%s4 + $0x2a4] sm:$0xf]
    %v2241 = vld [vmem:[%s4 + $0x2a8] sm:$0xf]
    %v2242 = vld [vmem:[%s4 + $0x2ac] sm:$0xf]
    %v2243 = vld [vmem:[%s4 + $0x2b0] sm:$0xf]
    %v2244 = vld [vmem:[%s4 + $0x2b4] sm:$0xf]
    %v2245 = vld [vmem:[%s4 + $0x2b8] sm:$0xf]
    %v2246 = vld [vmem:[%s4 + $0x2bc] sm:$0xf]
    %v2247 = vld [vmem:[%s4 + $0x2c0] sm:$0xf]
    %v2248 = vld [vmem:[%s4 + $0x2c4] sm:$0xf]
    %v2249 = vld [vmem:[%s4 + $0x2c8] sm:$0xf]
    %v2250 = vld [vmem:[%s4 + $0x2cc] sm:$0xf]
    %v2251 = vld [vmem:[%s4 + $0x2d0] sm:$0xf]
    %v2252 = vld [vmem:[%s4 + $0x2d4] sm:$0xf]
    %v2253 = vld [vmem:[%s4 + $0x2d8] sm:$0xf]
    %v2254 = vld [vmem:[%s4 + $0x2dc] sm:$0xf]
    %v2255 = vld [vmem:[%s4 + $0x2e0] sm:$0xf]
    %v2256 = vld [vmem:[%s4 + $0x2e4] sm:$0xf]
    %v2257 = vld [vmem:[%s4 + $0x2e8] sm:$0xf]
    %v2258 = vld [vmem:[%s4 + $0x2ec] sm:$0xf]
    %v2259 = vld [vmem:[%s4 + $0x2f0] sm:$0xf]
    %v2260 = vld [vmem:[%s4 + $0x2f4] sm:$0xf]
    %v2261 = vld [vmem:[%s4 + $0x2f8] sm:$0xf]
    %v2262 = vld [vmem:[%s4 + $0x2fc] sm:$0xf]
    %v2263 = vld [vmem:[%s4 + $0x300] sm:$0xf]
    %v2264 = vld [vmem:[%s4 + $0x304] sm:$0xf]
    %v2265 = vld [vmem:[%s4 + $0x308] sm:$0xf]
    %v2266 = vld [vmem:[%s4 + $0x30c] sm:$0xf]
    %v2267 = vld [vmem:[%s4 + $0x310] sm:$0xf]
    %v2268 = vld [vmem:[%s4 + $0x314] sm:$0xf]
    %v2269 = vld [vmem:[%s4 + $0x318] sm:$0xf]
    %v2270 = vld [vmem:[%s4 + $0x31c] sm:$0xf]
    %v2271 = vld [vmem:[%s4 + $0x320] sm:$0xf]
    %v2272 = vld [vmem:[%s4 + $0x324] sm:$0xf]
    %v2273 = vld [vmem:[%s4 + $0x328] sm:$0xf]
    %v2274 = vld [vmem:[%s4 + $0x32c] sm:$0xf]
    %v2275 = vld [vmem:[%s4 + $0x330] sm:$0xf]
    %v2276 = vld [vmem:[%s4 + $0x334] sm:$0xf]
    %v2277 = vld [vmem:[%s4 + $0x338] sm:$0xf]
    %v2278 = vld [vmem:[%s4 + $0x33c] sm:$0xf]
    %v2279 = vld [vmem:[%s4 + $0x340] sm:$0xf]
    %v2280 = vld [vmem:[%s4 + $0x344] sm:$0xf]
    %v2281 = vld [vmem:[%s4 + $0x348] sm:$0xf]
    %v2282 = vld [vmem:[%s4 + $0x34c] sm:$0xf]
    %v2283 = vld [vmem:[%s4 + $0x350] sm:$0xf]
    %v2284 = vld [vmem:[%s4 + $0x354] sm:$0xf]
    %v2285 = vld [vmem:[%s4 + $0x358] sm:$0xf]
    %v2286 = vld [vmem:[%s4 + $0x35c] sm:$0xf]
    %v2287 = vld [vmem:[%s4 + $0x360] sm:$0xf]
    %v2288 = vld [vmem:[%s4 + $0x364] sm:$0xf]
    %v2289 = vld [vmem:[%s4 + $0x368] sm:$0xf]
    %v2290 = vld [vmem:[%s4 + $0x36c] sm:$0xf]
    %v2291 = vld [vmem:[%s4 + $0x370] sm:$0xf]
    %v2292 = vld [vmem:[%s4 + $0x374] sm:$0xf]
    %v2293 = vld [vmem:[%s4 + $0x378] sm:$0xf]
    %v2294 = vld [vmem:[%s4 + $0x37c] sm:$0xf]
    %v2295 = vld [vmem:[%s4 + $0x380] sm:$0xf]
    %v2296 = vld [vmem:[%s4 + $0x384] sm:$0xf]
    %v2297 = vld [vmem:[%s4 + $0x388] sm:$0xf]
    %v2298 = vld [vmem:[%s4 + $0x38c] sm:$0xf]
    %v2299 = vld [vmem:[%s4 + $0x390] sm:$0xf]
    %v2300 = vld [vmem:[%s4 + $0x394] sm:$0xf]
    %v2301 = vld [vmem:[%s4 + $0x398] sm:$0xf]
    %v2302 = vld [vmem:[%s4 + $0x39c] sm:$0xf]
    %v2303 = vld [vmem:[%s4 + $0x3a0] sm:$0xf]
    %v2304 = vld [vmem:[%s4 + $0x3a4] sm:$0xf]
    %v2305 = vld [vmem:[%s4 + $0x3a8] sm:$0xf]
    %v2306 = vld [vmem:[%s4 + $0x3ac] sm:$0xf]
    %v2307 = vld [vmem:[%s4 + $0x3b0] sm:$0xf]
    %v2308 = vld [vmem:[%s4 + $0x3b4] sm:$0xf]
    %v2309 = vld [vmem:[%s4 + $0x3b8] sm:$0xf]
    %v2310 = vld [vmem:[%s4 + $0x3bc] sm:$0xf]
    %v2311 = vld [vmem:[%s4 + $0x3c0] sm:$0xf]
    %v2312 = vld [vmem:[%s4 + $0x3c4] sm:$0xf]
    %v2313 = vld [vmem:[%s4 + $0x3c8] sm:$0xf]
    %v2314 = vld [vmem:[%s4 + $0x3cc] sm:$0xf]
    %v2315 = vld [vmem:[%s4 + $0x3d0] sm:$0xf]
    %v2316 = vld [vmem:[%s4 + $0x3d4] sm:$0xf]
    %v2317 = vld [vmem:[%s4 + $0x3d8] sm:$0xf]
    %v2318 = vld [vmem:[%s4 + $0x3dc] sm:$0xf]
    %v2319 = vld [vmem:[%s4 + $0x3e0] sm:$0xf]
    %v2320 = vld [vmem:[%s4 + $0x3e4] sm:$0xf]
    %v2321 = vld [vmem:[%s4 + $0x3e8] sm:$0xf]
    %v2322 = vld [vmem:[%s4 + $0x3ec] sm:$0xf]
    %v2323 = vld [vmem:[%s4 + $0x3f0] sm:$0xf]
    %v2324 = vld [vmem:[%s4 + $0x3f4] sm:$0xf]
    %v2325 = vld [vmem:[%s4 + $0x3f8] sm:$0xf]
    %v2326 = vld [vmem:[%s4 + $0x3fc] sm:$0xf]
    %v2327 = vld [vmem:[%s1] sm:$0xf]
    %v2328 = vld [vmem:[%s1 + $0x4] sm:$0xf]
    %v2329 = vld [vmem:[%s5] sm:$0xf]
    %v2332 = vunpack.c.l.b16 %v2327
    %v2333 = vunpack.c.l.b16 %v2328
    %v2334 = vpack.c.b16 %v2333, %v2332
    %vm2335 = vcmask 64512
    %v2337 = vsel %vm2335, %v2334, 0
    %vm2339 = vcmask 1043456
    %v2341 = vsel %vm2339, %v2329, 0
    %2343 = vmatprep.subr.bf16.mxu0 0
    %2344 = vmatpush1.bf16.msra.mxu0 %v2341
    %2345 = vmatprep.subr.bf16.mxu0 0
    %2346 = vmatpush1.bf16.msra.mxu0 0
    %2347 = vmatprep.subr.bf16.mxu0 0
    %2348 = vmatpush1.bf16.msra.mxu0 0
    %2349 = vmatprep.subr.bf16.mxu0 0
    %2350 = vmatpush1.bf16.msra.mxu0 0
    %2351 = vmatprep.subr.bf16.mxu0 0
    %2352 = vmatpush1.bf16.msra.mxu0 0
    %2353 = vmatprep.subr.bf16.mxu0 0
    %2354 = vmatpush1.bf16.msra.mxu0 0
    %2355 = vmatprep.subr.bf16.mxu0 0
    %2356 = vmatpush1.bf16.msra.mxu0 0
    %2357 = vmatprep.subr.bf16.mxu0 0
    %2358 = vmatpush1.bf16.msra.mxu0 0
    %2359 = vmatprep.subr.bf16.mxu0 0
    %2360 = vmatpush1.bf16.msra.mxu0 0
    %2361 = vmatprep.subr.bf16.mxu0 0
    %2362 = vmatpush1.bf16.msra.mxu0 0
    %2363 = vmatprep.subr.bf16.mxu0 0
    %2364 = vmatpush1.bf16.msra.mxu0 0
    %2365 = vmatprep.subr.bf16.mxu0 0
    %2366 = vmatpush1.bf16.msra.mxu0 0
    %2367 = vmatprep.subr.bf16.mxu0 0
    %2368 = vmatpush1.bf16.msra.mxu0 0
    %2369 = vmatprep.subr.bf16.mxu0 0
    %2370 = vmatpush1.bf16.msra.mxu0 0
    %2371 = vmatprep.subr.bf16.mxu0 0
    %2372 = vmatpush1.bf16.msra.mxu0 0
    %2373 = vmatprep.subr.bf16.mxu0 0
    %2374 = vmatpush1.bf16.msra.mxu0 0
    %2375 = vmatprep.mubr.bf16.mxu0 0
    %2376 = vmatmul.mubr.bf16.gmra.mrb[0].mxu0 %v2337
    %v2377 = vpop.f32.mrb[0].mxu0
    %v2378 = vadd.f32 0.0, %v2377
    %v2379 = vpop.f32.mrb[0].mxu0
    %v2380 = vpop.f32.mrb[0].mxu0
    %v2381 = vadd.f32 0.0, %v2380
    %v2382 = vpop.f32.mrb[0].mxu0
    %2383 = vdwg.mxu0
    %v2640 = vunpack.c.l.b16 %v2071
    %v2641 = vunpack.c.l.b16 %v2072
    %v2642 = vunpack.c.l.b16 %v2073
    %v2643 = vunpack.c.l.b16 %v2074
    %v2644 = vunpack.c.l.b16 %v2075
    %v2645 = vunpack.c.l.b16 %v2076
    %v2646 = vunpack.c.l.b16 %v2077
    %v2647 = vunpack.c.l.b16 %v2078
    %v2648 = vunpack.c.l.b16 %v2079
    %v2649 = vunpack.c.l.b16 %v2080
    %v2650 = vunpack.c.l.b16 %v2081
    %v2651 = vunpack.c.l.b16 %v2082
    %v2652 = vunpack.c.l.b16 %v2083
    %v2653 = vunpack.c.l.b16 %v2084
    %v2654 = vunpack.c.l.b16 %v2085
    %v2655 = vunpack.c.l.b16 %v2086
    %v2656 = vunpack.c.l.b16 %v2087
    %v2657 = vunpack.c.l.b16 %v2088
    %v2658 = vunpack.c.l.b16 %v2089
    %v2659 = vunpack.c.l.b16 %v2090
    %v2660 = vunpack.c.l.b16 %v2091
    %v2661 = vunpack.c.l.b16 %v2092
    %v2662 = vunpack.c.l.b16 %v2093
    %v2663 = vunpack.c.l.b16 %v2094
    %v2664 = vunpack.c.l.b16 %v2095
    %v2665 = vunpack.c.l.b16 %v2096
    %v2666 = vunpack.c.l.b16 %v2097
    %v2667 = vunpack.c.l.b16 %v2098
    %v2668 = vunpack.c.l.b16 %v2099
    %v2669 = vunpack.c.l.b16 %v2100
    %v2670 = vunpack.c.l.b16 %v2101
    %v2671 = vunpack.c.l.b16 %v2102
    %v2672 = vunpack.c.l.b16 %v2103
    %v2673 = vunpack.c.l.b16 %v2104
    %v2674 = vunpack.c.l.b16 %v2105
    %v2675 = vunpack.c.l.b16 %v2106
    %v2676 = vunpack.c.l.b16 %v2107
    %v2677 = vunpack.c.l.b16 %v2108
    %v2678 = vunpack.c.l.b16 %v2109
    %v2679 = vunpack.c.l.b16 %v2110
    %v2680 = vunpack.c.l.b16 %v2111
    %v2681 = vunpack.c.l.b16 %v2112
    %v2682 = vunpack.c.l.b16 %v2113
    %v2683 = vunpack.c.l.b16 %v2114
    %v2684 = vunpack.c.l.b16 %v2115
    %v2685 = vunpack.c.l.b16 %v2116
    %v2686 = vunpack.c.l.b16 %v2117
    %v2687 = vunpack.c.l.b16 %v2118
    %v2688 = vunpack.c.l.b16 %v2119
    %v2689 = vunpack.c.l.b16 %v2120
    %v2690 = vunpack.c.l.b16 %v2121
    %v2691 = vunpack.c.l.b16 %v2122
    %v2692 = vunpack.c.l.b16 %v2123
    %v2693 = vunpack.c.l.b16 %v2124
    %v2694 = vunpack.c.l.b16 %v2125
    %v2695 = vunpack.c.l.b16 %v2126
    %v2696 = vunpack.c.l.b16 %v2127
    %v2697 = vunpack.c.l.b16 %v2128
    %v2698 = vunpack.c.l.b16 %v2129
    %v2699 = vunpack.c.l.b16 %v2130
    %v2700 = vunpack.c.l.b16 %v2131
    %v2701 = vunpack.c.l.b16 %v2132
    %v2702 = vunpack.c.l.b16 %v2133
    %v2703 = vunpack.c.l.b16 %v2134
    %v2704 = vunpack.c.l.b16 %v2135
    %v2705 = vunpack.c.l.b16 %v2136
    %v2706 = vunpack.c.l.b16 %v2137
    %v2707 = vunpack.c.l.b16 %v2138
    %v2708 = vunpack.c.l.b16 %v2139
    %v2709 = vunpack.c.l.b16 %v2140
    %v2710 = vunpack.c.l.b16 %v2141
    %v2711 = vunpack.c.l.b16 %v2142
    %v2712 = vunpack.c.l.b16 %v2143
    %v2713 = vunpack.c.l.b16 %v2144
    %v2714 = vunpack.c.l.b16 %v2145
    %v2715 = vunpack.c.l.b16 %v2146
    %v2716 = vunpack.c.l.b16 %v2147
    %v2717 = vunpack.c.l.b16 %v2148
    %v2718 = vunpack.c.l.b16 %v2149
    %v2719 = vunpack.c.l.b16 %v2150
    %v2720 = vunpack.c.l.b16 %v2151
    %v2721 = vunpack.c.l.b16 %v2152
    %v2722 = vunpack.c.l.b16 %v2153
    %v2723 = vunpack.c.l.b16 %v2154
    %v2724 = vunpack.c.l.b16 %v2155
    %v2725 = vunpack.c.l.b16 %v2156
    %v2726 = vunpack.c.l.b16 %v2157
    %v2727 = vunpack.c.l.b16 %v2158
    %v2728 = vunpack.c.l.b16 %v2159
    %v2729 = vunpack.c.l.b16 %v2160
    %v2730 = vunpack.c.l.b16 %v2161
    %v2731 = vunpack.c.l.b16 %v2162
    %v2732 = vunpack.c.l.b16 %v2163
    %v2733 = vunpack.c.l.b16 %v2164
    %v2734 = vunpack.c.l.b16 %v2165
    %v2735 = vunpack.c.l.b16 %v2166
    %v2736 = vunpack.c.l.b16 %v2167
    %v2737 = vunpack.c.l.b16 %v2168
    %v2738 = vunpack.c.l.b16 %v2169
    %v2739 = vunpack.c.l.b16 %v2170
    %v2740 = vunpack.c.l.b16 %v2171
    %v2741 = vunpack.c.l.b16 %v2172
    %v2742 = vunpack.c.l.b16 %v2173
    %v2743 = vunpack.c.l.b16 %v2174
    %v2744 = vunpack.c.l.b16 %v2175
    %v2745 = vunpack.c.l.b16 %v2176
    %v2746 = vunpack.c.l.b16 %v2177
    %v2747 = vunpack.c.l.b16 %v2178
    %v2748 = vunpack.c.l.b16 %v2179
    %v2749 = vunpack.c.l.b16 %v2180
    %v2750 = vunpack.c.l.b16 %v2181
    %v2751 = vunpack.c.l.b16 %v2182
    %v2752 = vunpack.c.l.b16 %v2183
    %v2753 = vunpack.c.l.b16 %v2184
    %v2754 = vunpack.c.l.b16 %v2185
    %v2755 = vunpack.c.l.b16 %v2186
    %v2756 = vunpack.c.l.b16 %v2187
    %v2757 = vunpack.c.l.b16 %v2188
    %v2758 = vunpack.c.l.b16 %v2189
    %v2759 = vunpack.c.l.b16 %v2190
    %v2760 = vunpack.c.l.b16 %v2191
    %v2761 = vunpack.c.l.b16 %v2192
    %v2762 = vunpack.c.l.b16 %v2193
    %v2763 = vunpack.c.l.b16 %v2194
    %v2764 = vunpack.c.l.b16 %v2195
    %v2765 = vunpack.c.l.b16 %v2196
    %v2766 = vunpack.c.l.b16 %v2197
    %v2767 = vunpack.c.l.b16 %v2198
    %v2768 = vunpack.c.l.b16 %v2199
    %v2769 = vunpack.c.l.b16 %v2200
    %v2770 = vunpack.c.l.b16 %v2201
    %v2771 = vunpack.c.l.b16 %v2202
    %v2772 = vunpack.c.l.b16 %v2203
    %v2773 = vunpack.c.l.b16 %v2204
    %v2774 = vunpack.c.l.b16 %v2205
    %v2775 = vunpack.c.l.b16 %v2206
    %v2776 = vunpack.c.l.b16 %v2207
    %v2777 = vunpack.c.l.b16 %v2208
    %v2778 = vunpack.c.l.b16 %v2209
    %v2779 = vunpack.c.l.b16 %v2210
    %v2780 = vunpack.c.l.b16 %v2211
    %v2781 = vunpack.c.l.b16 %v2212
    %v2782 = vunpack.c.l.b16 %v2213
    %v2783 = vunpack.c.l.b16 %v2214
    %v2784 = vunpack.c.l.b16 %v2215
    %v2785 = vunpack.c.l.b16 %v2216
    %v2786 = vunpack.c.l.b16 %v2217
    %v2787 = vunpack.c.l.b16 %v2218
    %v2788 = vunpack.c.l.b16 %v2219
    %v2789 = vunpack.c.l.b16 %v2220
    %v2790 = vunpack.c.l.b16 %v2221
    %v2791 = vunpack.c.l.b16 %v2222
    %v2792 = vunpack.c.l.b16 %v2223
    %v2793 = vunpack.c.l.b16 %v2224
    %v2794 = vunpack.c.l.b16 %v2225
    %v2795 = vunpack.c.l.b16 %v2226
    %v2796 = vunpack.c.l.b16 %v2227
    %v2797 = vunpack.c.l.b16 %v2228
    %v2798 = vunpack.c.l.b16 %v2229
    %v2799 = vunpack.c.l.b16 %v2230
    %v2800 = vunpack.c.l.b16 %v2231
    %v2801 = vunpack.c.l.b16 %v2232
    %v2802 = vunpack.c.l.b16 %v2233
    %v2803 = vunpack.c.l.b16 %v2234
    %v2804 = vunpack.c.l.b16 %v2235
    %v2805 = vunpack.c.l.b16 %v2236
    %v2806 = vunpack.c.l.b16 %v2237
    %v2807 = vunpack.c.l.b16 %v2238
    %v2808 = vunpack.c.l.b16 %v2239
    %v2809 = vunpack.c.l.b16 %v2240
    %v2810 = vunpack.c.l.b16 %v2241
    %v2811 = vunpack.c.l.b16 %v2242
    %v2812 = vunpack.c.l.b16 %v2243
    %v2813 = vunpack.c.l.b16 %v2244
    %v2814 = vunpack.c.l.b16 %v2245
    %v2815 = vunpack.c.l.b16 %v2246
    %v2816 = vunpack.c.l.b16 %v2247
    %v2817 = vunpack.c.l.b16 %v2248
    %v2818 = vunpack.c.l.b16 %v2249
    %v2819 = vunpack.c.l.b16 %v2250
    %v2820 = vunpack.c.l.b16 %v2251
    %v2821 = vunpack.c.l.b16 %v2252
    %v2822 = vunpack.c.l.b16 %v2253
    %v2823 = vunpack.c.l.b16 %v2254
    %v2824 = vunpack.c.l.b16 %v2255
    %v2825 = vunpack.c.l.b16 %v2256
    %v2826 = vunpack.c.l.b16 %v2257
    %v2827 = vunpack.c.l.b16 %v2258
    %v2828 = vunpack.c.l.b16 %v2259
    %v2829 = vunpack.c.l.b16 %v2260
    %v2830 = vunpack.c.l.b16 %v2261
    %v2831 = vunpack.c.l.b16 %v2262
    %v2832 = vunpack.c.l.b16 %v2263
    %v2833 = vunpack.c.l.b16 %v2264
    %v2834 = vunpack.c.l.b16 %v2265
    %v2835 = vunpack.c.l.b16 %v2266
    %v2836 = vunpack.c.l.b16 %v2267
    %v2837 = vunpack.c.l.b16 %v2268
    %v2838 = vunpack.c.l.b16 %v2269
    %v2839 = vunpack.c.l.b16 %v2270
    %v2840 = vunpack.c.l.b16 %v2271
    %v2841 = vunpack.c.l.b16 %v2272
    %v2842 = vunpack.c.l.b16 %v2273
    %v2843 = vunpack.c.l.b16 %v2274
    %v2844 = vunpack.c.l.b16 %v2275
    %v2845 = vunpack.c.l.b16 %v2276
    %v2846 = vunpack.c.l.b16 %v2277
    %v2847 = vunpack.c.l.b16 %v2278
    %v2848 = vunpack.c.l.b16 %v2279
    %v2849 = vunpack.c.l.b16 %v2280
    %v2850 = vunpack.c.l.b16 %v2281
    %v2851 = vunpack.c.l.b16 %v2282
    %v2852 = vunpack.c.l.b16 %v2283
    %v2853 = vunpack.c.l.b16 %v2284
    %v2854 = vunpack.c.l.b16 %v2285
    %v2855 = vunpack.c.l.b16 %v2286
    %v2856 = vunpack.c.l.b16 %v2287
    %v2857 = vunpack.c.l.b16 %v2288
    %v2858 = vunpack.c.l.b16 %v2289
    %v2859 = vunpack.c.l.b16 %v2290
    %v2860 = vunpack.c.l.b16 %v2291
    %v2861 = vunpack.c.l.b16 %v2292
    %v2862 = vunpack.c.l.b16 %v2293
    %v2863 = vunpack.c.l.b16 %v2294
    %v2864 = vunpack.c.l.b16 %v2295
    %v2865 = vunpack.c.l.b16 %v2296
    %v2866 = vunpack.c.l.b16 %v2297
    %v2867 = vunpack.c.l.b16 %v2298
    %v2868 = vunpack.c.l.b16 %v2299
    %v2869 = vunpack.c.l.b16 %v2300
    %v2870 = vunpack.c.l.b16 %v2301
    %v2871 = vunpack.c.l.b16 %v2302
    %v2872 = vunpack.c.l.b16 %v2303
    %v2873 = vunpack.c.l.b16 %v2304
    %v2874 = vunpack.c.l.b16 %v2305
    %v2875 = vunpack.c.l.b16 %v2306
    %v2876 = vunpack.c.l.b16 %v2307
    %v2877 = vunpack.c.l.b16 %v2308
    %v2878 = vunpack.c.l.b16 %v2309
    %v2879 = vunpack.c.l.b16 %v2310
    %v2880 = vunpack.c.l.b16 %v2311
    %v2881 = vunpack.c.l.b16 %v2312
    %v2882 = vunpack.c.l.b16 %v2313
    %v2883 = vunpack.c.l.b16 %v2314
    %v2884 = vunpack.c.l.b16 %v2315
    %v2885 = vunpack.c.l.b16 %v2316
    %v2886 = vunpack.c.l.b16 %v2317
    %v2887 = vunpack.c.l.b16 %v2318
    %v2888 = vunpack.c.l.b16 %v2319
    %v2889 = vunpack.c.l.b16 %v2320
    %v2890 = vunpack.c.l.b16 %v2321
    %v2891 = vunpack.c.l.b16 %v2322
    %v2892 = vunpack.c.l.b16 %v2323
    %v2893 = vunpack.c.l.b16 %v2324
    %v2894 = vunpack.c.l.b16 %v2325
    %v2895 = vunpack.c.l.b16 %v2326
    %v2896 = vpack.c.b16 %v2641, %v2640
    %v2897 = vpack.c.b16 %v2643, %v2642
    %v2898 = vpack.c.b16 %v2645, %v2644
    %v2899 = vpack.c.b16 %v2647, %v2646
    %v2900 = vpack.c.b16 %v2649, %v2648
    %v2901 = vpack.c.b16 %v2651, %v2650
    %v2902 = vpack.c.b16 %v2653, %v2652
    %v2903 = vpack.c.b16 %v2655, %v2654
    %v2904 = vpack.c.b16 %v2657, %v2656
    %v2905 = vpack.c.b16 %v2659, %v2658
    %v2906 = vpack.c.b16 %v2661, %v2660
    %v2907 = vpack.c.b16 %v2663, %v2662
    %v2908 = vpack.c.b16 %v2665, %v2664
    %v2909 = vpack.c.b16 %v2667, %v2666
    %v2910 = vpack.c.b16 %v2669, %v2668
    %v2911 = vpack.c.b16 %v2671, %v2670
    %v2912 = vpack.c.b16 %v2673, %v2672
    %v2913 = vpack.c.b16 %v2675, %v2674
    %v2914 = vpack.c.b16 %v2677, %v2676
    %v2915 = vpack.c.b16 %v2679, %v2678
    %v2916 = vpack.c.b16 %v2681, %v2680
    %v2917 = vpack.c.b16 %v2683, %v2682
    %v2918 = vpack.c.b16 %v2685, %v2684
    %v2919 = vpack.c.b16 %v2687, %v2686
    %v2920 = vpack.c.b16 %v2689, %v2688
    %v2921 = vpack.c.b16 %v2691, %v2690
    %v2922 = vpack.c.b16 %v2693, %v2692
    %v2923 = vpack.c.b16 %v2695, %v2694
    %v2924 = vpack.c.b16 %v2697, %v2696
    %v2925 = vpack.c.b16 %v2699, %v2698
    %v2926 = vpack.c.b16 %v2701, %v2700
    %v2927 = vpack.c.b16 %v2703, %v2702
    %v2928 = vpack.c.b16 %v2705, %v2704
    %v2929 = vpack.c.b16 %v2707, %v2706
    %v2930 = vpack.c.b16 %v2709, %v2708
    %v2931 = vpack.c.b16 %v2711, %v2710
    %v2932 = vpack.c.b16 %v2713, %v2712
    %v2933 = vpack.c.b16 %v2715, %v2714
    %v2934 = vpack.c.b16 %v2717, %v2716
    %v2935 = vpack.c.b16 %v2719, %v2718
    %v2936 = vpack.c.b16 %v2721, %v2720
    %v2937 = vpack.c.b16 %v2723, %v2722
    %v2938 = vpack.c.b16 %v2725, %v2724
    %v2939 = vpack.c.b16 %v2727, %v2726
    %v2940 = vpack.c.b16 %v2729, %v2728
    %v2941 = vpack.c.b16 %v2731, %v2730
    %v2942 = vpack.c.b16 %v2733, %v2732
    %v2943 = vpack.c.b16 %v2735, %v2734
    %v2944 = vpack.c.b16 %v2737, %v2736
    %v2945 = vpack.c.b16 %v2739, %v2738
    %v2946 = vpack.c.b16 %v2741, %v2740
    %v2947 = vpack.c.b16 %v2743, %v2742
    %v2948 = vpack.c.b16 %v2745, %v2744
    %v2949 = vpack.c.b16 %v2747, %v2746
    %v2950 = vpack.c.b16 %v2749, %v2748
    %v2951 = vpack.c.b16 %v2751, %v2750
    %v2952 = vpack.c.b16 %v2753, %v2752
    %v2953 = vpack.c.b16 %v2755, %v2754
    %v2954 = vpack.c.b16 %v2757, %v2756
    %v2955 = vpack.c.b16 %v2759, %v2758
    %v2956 = vpack.c.b16 %v2761, %v2760
    %v2957 = vpack.c.b16 %v2763, %v2762
    %v2958 = vpack.c.b16 %v2765, %v2764
    %v2959 = vpack.c.b16 %v2767, %v2766
    %v2960 = vpack.c.b16 %v2769, %v2768
    %v2961 = vpack.c.b16 %v2771, %v2770
    %v2962 = vpack.c.b16 %v2773, %v2772
    %v2963 = vpack.c.b16 %v2775, %v2774
    %v2964 = vpack.c.b16 %v2777, %v2776
    %v2965 = vpack.c.b16 %v2779, %v2778
    %v2966 = vpack.c.b16 %v2781, %v2780
    %v2967 = vpack.c.b16 %v2783, %v2782
    %v2968 = vpack.c.b16 %v2785, %v2784
    %v2969 = vpack.c.b16 %v2787, %v2786
    %v2970 = vpack.c.b16 %v2789, %v2788
    %v2971 = vpack.c.b16 %v2791, %v2790
    %v2972 = vpack.c.b16 %v2793, %v2792
    %v2973 = vpack.c.b16 %v2795, %v2794
    %v2974 = vpack.c.b16 %v2797, %v2796
    %v2975 = vpack.c.b16 %v2799, %v2798
    %v2976 = vpack.c.b16 %v2801, %v2800
    %v2977 = vpack.c.b16 %v2803, %v2802
    %v2978 = vpack.c.b16 %v2805, %v2804
    %v2979 = vpack.c.b16 %v2807, %v2806
    %v2980 = vpack.c.b16 %v2809, %v2808
    %v2981 = vpack.c.b16 %v2811, %v2810
    %v2982 = vpack.c.b16 %v2813, %v2812
    %v2983 = vpack.c.b16 %v2815, %v2814
    %v2984 = vpack.c.b16 %v2817, %v2816
    %v2985 = vpack.c.b16 %v2819, %v2818
    %v2986 = vpack.c.b16 %v2821, %v2820
    %v2987 = vpack.c.b16 %v2823, %v2822
    %v2988 = vpack.c.b16 %v2825, %v2824
    %v2989 = vpack.c.b16 %v2827, %v2826
    %v2990 = vpack.c.b16 %v2829, %v2828
    %v2991 = vpack.c.b16 %v2831, %v2830
    %v2992 = vpack.c.b16 %v2833, %v2832
    %v2993 = vpack.c.b16 %v2835, %v2834
    %v2994 = vpack.c.b16 %v2837, %v2836
    %v2995 = vpack.c.b16 %v2839, %v2838
    %v2996 = vpack.c.b16 %v2841, %v2840
    %v2997 = vpack.c.b16 %v2843, %v2842
    %v2998 = vpack.c.b16 %v2845, %v2844
    %v2999 = vpack.c.b16 %v2847, %v2846
    %v3000 = vpack.c.b16 %v2849, %v2848
    %v3001 = vpack.c.b16 %v2851, %v2850
    %v3002 = vpack.c.b16 %v2853, %v2852
    %v3003 = vpack.c.b16 %v2855, %v2854
    %v3004 = vpack.c.b16 %v2857, %v2856
    %v3005 = vpack.c.b16 %v2859, %v2858
    %v3006 = vpack.c.b16 %v2861, %v2860
    %v3007 = vpack.c.b16 %v2863, %v2862
    %v3008 = vpack.c.b16 %v2865, %v2864
    %v3009 = vpack.c.b16 %v2867, %v2866
    %v3010 = vpack.c.b16 %v2869, %v2868
    %v3011 = vpack.c.b16 %v2871, %v2870
    %v3012 = vpack.c.b16 %v2873, %v2872
    %v3013 = vpack.c.b16 %v2875, %v2874
    %v3014 = vpack.c.b16 %v2877, %v2876
    %v3015 = vpack.c.b16 %v2879, %v2878
    %v3016 = vpack.c.b16 %v2881, %v2880
    %v3017 = vpack.c.b16 %v2883, %v2882
    %v3018 = vpack.c.b16 %v2885, %v2884
    %v3019 = vpack.c.b16 %v2887, %v2886
    %v3020 = vpack.c.b16 %v2889, %v2888
    %v3021 = vpack.c.b16 %v2891, %v2890
    %v3022 = vpack.c.b16 %v2893, %v2892
    %v3023 = vpack.c.b16 %v2895, %v2894
    %3152 = vmatprep.subr.bf16.mxu0 0
    %3153 = vmatpush1.bf16.msra.mxu0 %v2896
    %3154 = vmatprep.subr.bf16.mxu0 0
    %3155 = vmatpush1.bf16.msra.mxu0 %v2897
    %3156 = vmatprep.subr.bf16.mxu0 0
    %3157 = vmatpush1.bf16.msra.mxu0 %v2898
    %3158 = vmatprep.subr.bf16.mxu0 0
    %3159 = vmatpush1.bf16.msra.mxu0 %v2899
    %3160 = vmatprep.subr.bf16.mxu0 0
    %3161 = vmatpush1.bf16.msra.mxu0 %v2900
    %3162 = vmatprep.subr.bf16.mxu0 0
    %3163 = vmatpush1.bf16.msra.mxu0 %v2901
    %3164 = vmatprep.subr.bf16.mxu0 0
    %3165 = vmatpush1.bf16.msra.mxu0 %v2902
    %3166 = vmatprep.subr.bf16.mxu0 0
    %3167 = vmatpush1.bf16.msra.mxu0 %v2903
    %3168 = vmatprep.subr.bf16.mxu0 0
    %3169 = vmatpush1.bf16.msra.mxu0 %v2904
    %3170 = vmatprep.subr.bf16.mxu0 0
    %3171 = vmatpush1.bf16.msra.mxu0 %v2905
    %3172 = vmatprep.subr.bf16.mxu0 0
    %3173 = vmatpush1.bf16.msra.mxu0 %v2906
    %3174 = vmatprep.subr.bf16.mxu0 0
    %3175 = vmatpush1.bf16.msra.mxu0 %v2907
    %3176 = vmatprep.subr.bf16.mxu0 0
    %3177 = vmatpush1.bf16.msra.mxu0 %v2908
    %3178 = vmatprep.subr.bf16.mxu0 0
    %3179 = vmatpush1.bf16.msra.mxu0 %v2909
    %3180 = vmatprep.subr.bf16.mxu0 0
    %3181 = vmatpush1.bf16.msra.mxu0 %v2910
    %3182 = vmatprep.subr.bf16.mxu0 0
    %3183 = vmatpush1.bf16.msra.mxu0 %v2911
    %3184 = vmatprep.mubr.bf16.mxu0 %v2056
    %3185 = vmatmul.mubr.bf16.gmra.mrb[0].mxu0 %v2055
    %v3186 = vpop.f32.mrb[0].mxu0
    %v3187 = vadd.f32 %v2378, %v3186
    %v3188 = vpop.f32.mrb[0].mxu0
    %v3189 = vpop.f32.mrb[0].mxu0
    %v3190 = vadd.f32 %v2381, %v3189
    %v3191 = vpop.f32.mrb[0].mxu0
    %3192 = vdwg.mxu0
    %3193 = vmatprep.subr.bf16.mxu0 0
    %3194 = vmatpush1.bf16.msra.mxu0 %v2912
    %3195 = vmatprep.subr.bf16.mxu0 0
    %3196 = vmatpush1.bf16.msra.mxu0 %v2913
    %3197 = vmatprep.subr.bf16.mxu0 0
    %3198 = vmatpush1.bf16.msra.mxu0 %v2914
    %3199 = vmatprep.subr.bf16.mxu0 0
    %3200 = vmatpush1.bf16.msra.mxu0 %v2915
    %3201 = vmatprep.subr.bf16.mxu0 0
    %3202 = vmatpush1.bf16.msra.mxu0 %v2916
    %3203 = vmatprep.subr.bf16.mxu0 0
    %3204 = vmatpush1.bf16.msra.mxu0 %v2917
    %3205 = vmatprep.subr.bf16.mxu0 0
    %3206 = vmatpush1.bf16.msra.mxu0 %v2918
    %3207 = vmatprep.subr.bf16.mxu0 0
    %3208 = vmatpush1.bf16.msra.mxu0 %v2919
    %3209 = vmatprep.subr.bf16.mxu0 0
    %3210 = vmatpush1.bf16.msra.mxu0 %v2920
    %3211 = vmatprep.subr.bf16.mxu0 0
    %3212 = vmatpush1.bf16.msra.mxu0 %v2921
    %3213 = vmatprep.subr.bf16.mxu0 0
    %3214 = vmatpush1.bf16.msra.mxu0 %v2922
    %3215 = vmatprep.subr.bf16.mxu0 0
    %3216 = vmatpush1.bf16.msra.mxu0 %v2923
    %3217 = vmatprep.subr.bf16.mxu0 0
    %3218 = vmatpush1.bf16.msra.mxu0 %v2924
    %3219 = vmatprep.subr.bf16.mxu0 0
    %3220 = vmatpush1.bf16.msra.mxu0 %v2925
    %3221 = vmatprep.subr.bf16.mxu0 0
    %3222 = vmatpush1.bf16.msra.mxu0 %v2926
    %3223 = vmatprep.subr.bf16.mxu0 0
    %3224 = vmatpush1.bf16.msra.mxu0 %v2927
    %3225 = vmatprep.mubr.bf16.mxu0 %v2058
    %3226 = vmatmul.mubr.bf16.gmra.mrb[0].mxu0 %v2057
    %v3227 = vpop.f32.mrb[0].mxu0
    %v3228 = vadd.f32 %v3187, %v3227
    %v3229 = vpop.f32.mrb[0].mxu0
    %v3230 = vpop.f32.mrb[0].mxu0
    %v3231 = vadd.f32 %v3190, %v3230
    %v3232 = vpop.f32.mrb[0].mxu0
    %3233 = vdwg.mxu0
    %3234 = vmatprep.subr.bf16.mxu0 0
    %3235 = vmatpush1.bf16.msra.mxu0 %v2928
    %3236 = vmatprep.subr.bf16.mxu0 0
    %3237 = vmatpush1.bf16.msra.mxu0 %v2929
    %3238 = vmatprep.subr.bf16.mxu0 0
    %3239 = vmatpush1.bf16.msra.mxu0 %v2930
    %3240 = vmatprep.subr.bf16.mxu0 0
    %3241 = vmatpush1.bf16.msra.mxu0 %v2931
    %3242 = vmatprep.subr.bf16.mxu0 0
    %3243 = vmatpush1.bf16.msra.mxu0 %v2932
    %3244 = vmatprep.subr.bf16.mxu0 0
    %3245 = vmatpush1.bf16.msra.mxu0 %v2933
    %3246 = vmatprep.subr.bf16.mxu0 0
    %3247 = vmatpush1.bf16.msra.mxu0 %v2934
    %3248 = vmatprep.subr.bf16.mxu0 0
    %3249 = vmatpush1.bf16.msra.mxu0 %v2935
    %3250 = vmatprep.subr.bf16.mxu0 0
    %3251 = vmatpush1.bf16.msra.mxu0 %v2936
    %3252 = vmatprep.subr.bf16.mxu0 0
    %3253 = vmatpush1.bf16.msra.mxu0 %v2937
    %3254 = vmatprep.subr.bf16.mxu0 0
    %3255 = vmatpush1.bf16.msra.mxu0 %v2938
    %3256 = vmatprep.subr.bf16.mxu0 0
    %3257 = vmatpush1.bf16.msra.mxu0 %v2939
    %3258 = vmatprep.subr.bf16.mxu0 0
    %3259 = vmatpush1.bf16.msra.mxu0 %v2940
    %3260 = vmatprep.subr.bf16.mxu0 0
    %3261 = vmatpush1.bf16.msra.mxu0 %v2941
    %3262 = vmatprep.subr.bf16.mxu0 0
    %3263 = vmatpush1.bf16.msra.mxu0 %v2942
    %3264 = vmatprep.subr.bf16.mxu0 0
    %3265 = vmatpush1.bf16.msra.mxu0 %v2943
    %3266 = vmatprep.mubr.bf16.mxu0 %v2060
    %3267 = vmatmul.mubr.bf16.gmra.mrb[0].mxu0 %v2059
    %v3268 = vpop.f32.mrb[0].mxu0
    %v3269 = vadd.f32 %v3228, %v3268
    %v3270 = vpop.f32.mrb[0].mxu0
    %v3271 = vpop.f32.mrb[0].mxu0
    %v3272 = vadd.f32 %v3231, %v3271
    %v3273 = vpop.f32.mrb[0].mxu0
    %3274 = vdwg.mxu0
    %3275 = vmatprep.subr.bf16.mxu0 0
    %3276 = vmatpush1.bf16.msra.mxu0 %v2944
    %3277 = vmatprep.subr.bf16.mxu0 0
    %3278 = vmatpush1.bf16.msra.mxu0 %v2945
    %3279 = vmatprep.subr.bf16.mxu0 0
    %3280 = vmatpush1.bf16.msra.mxu0 %v2946
    %3281 = vmatprep.subr.bf16.mxu0 0
    %3282 = vmatpush1.bf16.msra.mxu0 %v2947
    %3283 = vmatprep.subr.bf16.mxu0 0
    %3284 = vmatpush1.bf16.msra.mxu0 %v2948
    %3285 = vmatprep.subr.bf16.mxu0 0
    %3286 = vmatpush1.bf16.msra.mxu0 %v2949
    %3287 = vmatprep.subr.bf16.mxu0 0
    %3288 = vmatpush1.bf16.msra.mxu0 %v2950
    %3289 = vmatprep.subr.bf16.mxu0 0
    %3290 = vmatpush1.bf16.msra.mxu0 %v2951
    %3291 = vmatprep.subr.bf16.mxu0 0
    %3292 = vmatpush1.bf16.msra.mxu0 %v2952
    %3293 = vmatprep.subr.bf16.mxu0 0
    %3294 = vmatpush1.bf16.msra.mxu0 %v2953
    %3295 = vmatprep.subr.bf16.mxu0 0
    %3296 = vmatpush1.bf16.msra.mxu0 %v2954
    %3297 = vmatprep.subr.bf16.mxu0 0
    %3298 = vmatpush1.bf16.msra.mxu0 %v2955
    %3299 = vmatprep.subr.bf16.mxu0 0
    %3300 = vmatpush1.bf16.msra.mxu0 %v2956
    %3301 = vmatprep.subr.bf16.mxu0 0
    %3302 = vmatpush1.bf16.msra.mxu0 %v2957
    %3303 = vmatprep.subr.bf16.mxu0 0
    %3304 = vmatpush1.bf16.msra.mxu0 %v2958
    %3305 = vmatprep.subr.bf16.mxu0 0
    %3306 = vmatpush1.bf16.msra.mxu0 %v2959
    %3307 = vmatprep.mubr.bf16.mxu0 %v2062
    %3308 = vmatmul.mubr.bf16.gmra.mrb[0].mxu0 %v2061
    %v3309 = vpop.f32.mrb[0].mxu0
    %v3310 = vadd.f32 %v3269, %v3309
    %v3311 = vpop.f32.mrb[0].mxu0
    %v3312 = vpop.f32.mrb[0].mxu0
    %v3313 = vadd.f32 %v3272, %v3312
    %v3314 = vpop.f32.mrb[0].mxu0
    %3315 = vdwg.mxu0
    %3316 = vmatprep.subr.bf16.mxu0 0
    %3317 = vmatpush1.bf16.msra.mxu0 %v2960
    %3318 = vmatprep.subr.bf16.mxu0 0
    %3319 = vmatpush1.bf16.msra.mxu0 %v2961
    %3320 = vmatprep.subr.bf16.mxu0 0
    %3321 = vmatpush1.bf16.msra.mxu0 %v2962
    %3322 = vmatprep.subr.bf16.mxu0 0
    %3323 = vmatpush1.bf16.msra.mxu0 %v2963
    %3324 = vmatprep.subr.bf16.mxu0 0
    %3325 = vmatpush1.bf16.msra.mxu0 %v2964
    %3326 = vmatprep.subr.bf16.mxu0 0
    %3327 = vmatpush1.bf16.msra.mxu0 %v2965
    %3328 = vmatprep.subr.bf16.mxu0 0
    %3329 = vmatpush1.bf16.msra.mxu0 %v2966
    %3330 = vmatprep.subr.bf16.mxu0 0
    %3331 = vmatpush1.bf16.msra.mxu0 %v2967
    %3332 = vmatprep.subr.bf16.mxu0 0
    %3333 = vmatpush1.bf16.msra.mxu0 %v2968
    %3334 = vmatprep.subr.bf16.mxu0 0
    %3335 = vmatpush1.bf16.msra.mxu0 %v2969
    %3336 = vmatprep.subr.bf16.mxu0 0
    %3337 = vmatpush1.bf16.msra.mxu0 %v2970
    %3338 = vmatprep.subr.bf16.mxu0 0
    %3339 = vmatpush1.bf16.msra.mxu0 %v2971
    %3340 = vmatprep.subr.bf16.mxu0 0
    %3341 = vmatpush1.bf16.msra.mxu0 %v2972
    %3342 = vmatprep.subr.bf16.mxu0 0
    %3343 = vmatpush1.bf16.msra.mxu0 %v2973
    %3344 = vmatprep.subr.bf16.mxu0 0
    %3345 = vmatpush1.bf16.msra.mxu0 %v2974
    %3346 = vmatprep.subr.bf16.mxu0 0
    %3347 = vmatpush1.bf16.msra.mxu0 %v2975
    %3348 = vmatprep.mubr.bf16.mxu0 %v2064
    %3349 = vmatmul.mubr.bf16.gmra.mrb[0].mxu0 %v2063
    %v3350 = vpop.f32.mrb[0].mxu0
    %v3351 = vadd.f32 %v3310, %v3350
    %v3352 = vpop.f32.mrb[0].mxu0
    %v3353 = vpop.f32.mrb[0].mxu0
    %v3354 = vadd.f32 %v3313, %v3353
    %v3355 = vpop.f32.mrb[0].mxu0
    %3356 = vdwg.mxu0
    %3357 = vmatprep.subr.bf16.mxu0 0
    %3358 = vmatpush1.bf16.msra.mxu0 %v2976
    %3359 = vmatprep.subr.bf16.mxu0 0
    %3360 = vmatpush1.bf16.msra.mxu0 %v2977
    %3361 = vmatprep.subr.bf16.mxu0 0
    %3362 = vmatpush1.bf16.msra.mxu0 %v2978
    %3363 = vmatprep.subr.bf16.mxu0 0
    %3364 = vmatpush1.bf16.msra.mxu0 %v2979
    %3365 = vmatprep.subr.bf16.mxu0 0
    %3366 = vmatpush1.bf16.msra.mxu0 %v2980
    %3367 = vmatprep.subr.bf16.mxu0 0
    %3368 = vmatpush1.bf16.msra.mxu0 %v2981
    %3369 = vmatprep.subr.bf16.mxu0 0
    %3370 = vmatpush1.bf16.msra.mxu0 %v2982
    %3371 = vmatprep.subr.bf16.mxu0 0
    %3372 = vmatpush1.bf16.msra.mxu0 %v2983
    %3373 = vmatprep.subr.bf16.mxu0 0
    %3374 = vmatpush1.bf16.msra.mxu0 %v2984
    %3375 = vmatprep.subr.bf16.mxu0 0
    %3376 = vmatpush1.bf16.msra.mxu0 %v2985
    %3377 = vmatprep.subr.bf16.mxu0 0
    %3378 = vmatpush1.bf16.msra.mxu0 %v2986
    %3379 = vmatprep.subr.bf16.mxu0 0
    %3380 = vmatpush1.bf16.msra.mxu0 %v2987
    %3381 = vmatprep.subr.bf16.mxu0 0
    %3382 = vmatpush1.bf16.msra.mxu0 %v2988
    %3383 = vmatprep.subr.bf16.mxu0 0
    %3384 = vmatpush1.bf16.msra.mxu0 %v2989
    %3385 = vmatprep.subr.bf16.mxu0 0
    %3386 = vmatpush1.bf16.msra.mxu0 %v2990
    %3387 = vmatprep.subr.bf16.mxu0 0
    %3388 = vmatpush1.bf16.msra.mxu0 %v2991
    %3389 = vmatprep.mubr.bf16.mxu0 %v2066
    %3390 = vmatmul.mubr.bf16.gmra.mrb[0].mxu0 %v2065
    %v3391 = vpop.f32.mrb[0].mxu0
    %v3392 = vadd.f32 %v3351, %v3391
    %v3393 = vpop.f32.mrb[0].mxu0
    %v3394 = vpop.f32.mrb[0].mxu0
    %v3395 = vadd.f32 %v3354, %v3394
    %v3396 = vpop.f32.mrb[0].mxu0
    %3397 = vdwg.mxu0
    %3398 = vmatprep.subr.bf16.mxu0 0
    %3399 = vmatpush1.bf16.msra.mxu0 %v2992
    %3400 = vmatprep.subr.bf16.mxu0 0
    %3401 = vmatpush1.bf16.msra.mxu0 %v2993
    %3402 = vmatprep.subr.bf16.mxu0 0
    %3403 = vmatpush1.bf16.msra.mxu0 %v2994
    %3404 = vmatprep.subr.bf16.mxu0 0
    %3405 = vmatpush1.bf16.msra.mxu0 %v2995
    %3406 = vmatprep.subr.bf16.mxu0 0
    %3407 = vmatpush1.bf16.msra.mxu0 %v2996
    %3408 = vmatprep.subr.bf16.mxu0 0
    %3409 = vmatpush1.bf16.msra.mxu0 %v2997
    %3410 = vmatprep.subr.bf16.mxu0 0
    %3411 = vmatpush1.bf16.msra.mxu0 %v2998
    %3412 = vmatprep.subr.bf16.mxu0 0
    %3413 = vmatpush1.bf16.msra.mxu0 %v2999
    %3414 = vmatprep.subr.bf16.mxu0 0
    %3415 = vmatpush1.bf16.msra.mxu0 %v3000
    %3416 = vmatprep.subr.bf16.mxu0 0
    %3417 = vmatpush1.bf16.msra.mxu0 %v3001
    %3418 = vmatprep.subr.bf16.mxu0 0
    %3419 = vmatpush1.bf16.msra.mxu0 %v3002
    %3420 = vmatprep.subr.bf16.mxu0 0
    %3421 = vmatpush1.bf16.msra.mxu0 %v3003
    %3422 = vmatprep.subr.bf16.mxu0 0
    %3423 = vmatpush1.bf16.msra.mxu0 %v3004
    %3424 = vmatprep.subr.bf16.mxu0 0
    %3425 = vmatpush1.bf16.msra.mxu0 %v3005
    %3426 = vmatprep.subr.bf16.mxu0 0
    %3427 = vmatpush1.bf16.msra.mxu0 %v3006
    %3428 = vmatprep.subr.bf16.mxu0 0
    %3429 = vmatpush1.bf16.msra.mxu0 %v3007
    %3430 = vmatprep.mubr.bf16.mxu0 %v2068
    %3431 = vmatmul.mubr.bf16.gmra.mrb[0].mxu0 %v2067
    %v3432 = vpop.f32.mrb[0].mxu0
    %v3433 = vadd.f32 %v3392, %v3432
    %v3434 = vpop.f32.mrb[0].mxu0
    %v3435 = vpop.f32.mrb[0].mxu0
    %v3436 = vadd.f32 %v3395, %v3435
    %v3437 = vpop.f32.mrb[0].mxu0
    %3438 = vdwg.mxu0
    %3439 = vmatprep.subr.bf16.mxu0 0
    %3440 = vmatpush1.bf16.msra.mxu0 %v3008
    %3441 = vmatprep.subr.bf16.mxu0 0
    %3442 = vmatpush1.bf16.msra.mxu0 %v3009
    %3443 = vmatprep.subr.bf16.mxu0 0
    %3444 = vmatpush1.bf16.msra.mxu0 %v3010
    %3445 = vmatprep.subr.bf16.mxu0 0
    %3446 = vmatpush1.bf16.msra.mxu0 %v3011
    %3447 = vmatprep.subr.bf16.mxu0 0
    %3448 = vmatpush1.bf16.msra.mxu0 %v3012
    %3449 = vmatprep.subr.bf16.mxu0 0
    %3450 = vmatpush1.bf16.msra.mxu0 %v3013
    %3451 = vmatprep.subr.bf16.mxu0 0
    %3452 = vmatpush1.bf16.msra.mxu0 %v3014
    %3453 = vmatprep.subr.bf16.mxu0 0
    %3454 = vmatpush1.bf16.msra.mxu0 %v3015
    %3455 = vmatprep.subr.bf16.mxu0 0
    %3456 = vmatpush1.bf16.msra.mxu0 %v3016
    %3457 = vmatprep.subr.bf16.mxu0 0
    %3458 = vmatpush1.bf16.msra.mxu0 %v3017
    %3459 = vmatprep.subr.bf16.mxu0 0
    %3460 = vmatpush1.bf16.msra.mxu0 %v3018
    %3461 = vmatprep.subr.bf16.mxu0 0
    %3462 = vmatpush1.bf16.msra.mxu0 %v3019
    %3463 = vmatprep.subr.bf16.mxu0 0
    %3464 = vmatpush1.bf16.msra.mxu0 %v3020
    %3465 = vmatprep.subr.bf16.mxu0 0
    %3466 = vmatpush1.bf16.msra.mxu0 %v3021
    %3467 = vmatprep.subr.bf16.mxu0 0
    %3468 = vmatpush1.bf16.msra.mxu0 %v3022
    %3469 = vmatprep.subr.bf16.mxu0 0
    %3470 = vmatpush1.bf16.msra.mxu0 %v3023
    %3471 = vmatprep.mubr.bf16.mxu0 %v2070
    %3472 = vmatmul.mubr.bf16.gmra.mrb[0].mxu0 %v2069
    %v3473 = vpop.f32.mrb[0].mxu0
    %v3474 = vadd.f32 %v3433, %v3473
    %v3475 = vpop.f32.mrb[0].mxu0
    %v3476 = vpop.f32.mrb[0].mxu0
    %v3477 = vadd.f32 %v3436, %v3476
    %v3478 = vpop.f32.mrb[0].mxu0
    %3479 = vdwg.mxu0
    %v3480 = vld [vmem:[%s6] sm:$0x1]
    %v3482 = vlaneseq
    %v3483 = vshrl.u32 %v3482, 7
    %v3484 = vsub.s32 0, %v3483
    %v3485 = vrot.slane %v3480, %v3484
    %v3487 = vadd.f32 %v3474, %v3485
    %v3488 = vadd.f32 %v3477, %v3485
    %v3489 = vmax.f32 %v3487, 0.0
    %v3490 = vmax.f32 %v3488, 0.0
    %v3491 = vpack.c.bf16 %v3490, %v3489
    %v3492 = vld [vmem:[%s7] sm:$0xf]
    %v3493 = vld [vmem:[%s7 + $0x4] sm:$0xf]
    %v3494 = vld [vmem:[%s7 + $0x8] sm:$0xf]
    %v3495 = vld [vmem:[%s7 + $0xc] sm:$0xf]
    %v3496 = vld [vmem:[%s8] sm:$0x1]
    %v3498 = vlaneseq
    %v3499 = vshrl.u32 %v3498, 7
    %v3500 = vsub.s32 0, %v3499
    %v3501 = vrot.slane %v3496, %v3500
    %v3507 = vunpack.c.l.b16 %v3492
    %v3508 = vunpack.c.l.b16 %v3493
    %v3509 = vunpack.c.l.b16 %v3494
    %v3510 = vunpack.c.l.b16 %v3495
    %v3511 = vpack.c.b16 %v3508, %v3507
    %v3512 = vpack.c.b16 %v3510, %v3509
    %vm3515 = vcmask 261120
    %v3517 = vsel %vm3515, %v3491, 0
    %3519 = vmatprep.subr.bf16.mxu0 0
    %3520 = vmatpush1.bf16.msra.mxu0 %v3511
    %3521 = vmatprep.subr.bf16.mxu0 0
    %3522 = vmatpush1.bf16.msra.mxu0 %v3512
    %3523 = vmatprep.subr.bf16.mxu0 0
    %3524 = vmatpush1.bf16.msra.mxu0 0
    %3525 = vmatprep.subr.bf16.mxu0 0
    %3526 = vmatpush1.bf16.msra.mxu0 0
    %3527 = vmatprep.subr.bf16.mxu0 0
    %3528 = vmatpush1.bf16.msra.mxu0 0
    %3529 = vmatprep.subr.bf16.mxu0 0
    %3530 = vmatpush1.bf16.msra.mxu0 0
    %3531 = vmatprep.subr.bf16.mxu0 0
    %3532 = vmatpush1.bf16.msra.mxu0 0
    %3533 = vmatprep.subr.bf16.mxu0 0
    %3534 = vmatpush1.bf16.msra.mxu0 0
    %3535 = vmatprep.subr.bf16.mxu0 0
    %3536 = vmatpush1.bf16.msra.mxu0 0
    %3537 = vmatprep.subr.bf16.mxu0 0
    %3538 = vmatpush1.bf16.msra.mxu0 0
    %3539 = vmatprep.subr.bf16.mxu0 0
    %3540 = vmatpush1.bf16.msra.mxu0 0
    %3541 = vmatprep.subr.bf16.mxu0 0
    %3542 = vmatpush1.bf16.msra.mxu0 0
    %3543 = vmatprep.subr.bf16.mxu0 0
    %3544 = vmatpush1.bf16.msra.mxu0 0
    %3545 = vmatprep.subr.bf16.mxu0 0
    %3546 = vmatpush1.bf16.msra.mxu0 0
    %3547 = vmatprep.subr.bf16.mxu0 0
    %3548 = vmatpush1.bf16.msra.mxu0 0
    %3549 = vmatprep.subr.bf16.mxu0 0
    %3550 = vmatpush1.bf16.msra.mxu0 0
    %3551 = vmatprep.mubr.bf16.mxu0 0
    %3552 = vmatmul.mubr.bf16.gmra.mrb[0].mxu0 %v3517
    %v3553 = vpop.f32.mrb[0].mxu0
    %v3554 = vadd.f32 %v3501, %v3553
    %v3555 = vpop.f32.mrb[0].mxu0
    %v3556 = vpop.f32.mrb[0].mxu0
    %v3557 = vadd.f32 %v3501, %v3556
    %v3558 = vpop.f32.mrb[0].mxu0
    %3559 = vdwg.mxu0
    %v3560 = vtanh.pop %v3554
    %v3561 = vtanh.pop %v3557
    %3562 = vst.msk [vmem:[%s9] sm:$0xff] %vm2335, %v3560
    %3563 = vst.msk [vmem:[%s9 + $0x8] sm:$0xff] %vm2335, %v3561
    // Predicated region
    $region42: #{tpu_custom_call.1} parent=1 // pred_check
      _
    $region43: #{tpu_custom_call.1} parent=1 // pred_check_branch
      %3565 = sbr.rel (0) target = $region45
    $region44: #{tpu_custom_call.1} parent=1 // pred_region
      _
    $region45: #{tpu_custom_call.1} parent=1 // pred_fallthru
      _
    // Predicated region
    $region46: #{tpu_custom_call.1} parent=1 // pred_check
      _
    $region47: #{tpu_custom_call.1} parent=1 // pred_check_branch
      %3567 = sbr.rel (0) target = $region49
    $region48: #{tpu_custom_call.1} parent=1 // pred_region
      _
    $region49: #{tpu_custom_call.1} parent=1 // pred_fallthru
      _
    %3568 = vsyncpa [#allocation3], 1

</llo_original>
